<compile_context>
chip_gen: v7x
topology: tpu7x:2x2x1
jax: 0.10.0
libtpu: 0.0.40
codegen_flags: <defaults>
</compile_context>

<pallas_src>
import functools
import math

import jax
import jax.numpy as jnp
import numpy as np
from jax import lax
from jax.experimental import pallas as pl
from jax.experimental.pallas import tpu as pltpu


def _xavier_uniform(key, out_f, in_f, dtype=jnp.float32):
    """Matches torch.nn.init.xavier_uniform_ for a (out_f, in_f) weight."""
    bound = math.sqrt(6.0 / (in_f + out_f))
    return jax.random.uniform(key, (out_f, in_f), dtype=dtype,
                              minval=-bound, maxval=bound)


def make_params(key, d_model, d_k, d_v, h):
    """PyTorch nn.Linear convention: W has shape (out_features, in_features)."""
    kq, kk, kv, ko = jax.random.split(key, 4)
    return {
        "wq": _xavier_uniform(kq, h * d_k, d_model),
        "bq": jnp.zeros((1, h * d_k), jnp.float32),
        "wk": _xavier_uniform(kk, h * d_k, d_model),
        "bk": jnp.zeros((1, h * d_k), jnp.float32),
        "wv": _xavier_uniform(kv, h * d_v, d_model),
        "bv": jnp.zeros((1, h * d_v), jnp.float32),
        "wo": _xavier_uniform(ko, d_model, h * d_v),
        "bo": jnp.zeros((1, d_model), jnp.float32),
    }


def _choose_q_tile(nq):
    """Query-row tile: 128-row blocks when they divide nq, else the full nq.

    tile == nq always satisfies the (8,128) BlockSpec rule (full-dim block);
    128 is a multiple of 8 so tiled blocks are legal too.
    """
    if nq > 128 and nq % 128 == 0:
        return 128
    return nq


def _sdpa_kernel(d_k, d_v, h, compute_dtype,
                 q_in_ref, k_in_ref, v_in_ref,
                 wq_ref, bq_ref, wk_ref, bk_ref,
                 wv_ref, bv_ref, wo_ref, bo_ref,
                 out_ref, ctx_ref):
    # Squeezed batch dim -> refs are already 2-D: (tq, d_model) / (nk, d_model)
    xq = q_in_ref[...].astype(compute_dtype)
    xk = k_in_ref[...].astype(compute_dtype)
    xv = v_in_ref[...].astype(compute_dtype)

    # Q/K/V projections as single lane-dense matmuls (output width h*d_k /
    # h*d_v).  Weights are pre-transposed in the wrapper -> no `.T` here.
    # bf16 (or f32) MXU inputs, f32 accumulation; biases added in f32.
    q = jnp.dot(xq, wq_ref[...], preferred_element_type=jnp.float32) + bq_ref[...]
    k = jnp.dot(xk, wk_ref[...], preferred_element_type=jnp.float32) + bk_ref[...]
    v = jnp.dot(xv, wv_ref[...], preferred_element_type=jnp.float32) + bv_ref[...]

    # Fold 1/sqrt(d_k) into q once (touches nq*h*d_k elems, not h*nq*nk).
    q = q * jnp.float32(1.0 / math.sqrt(d_k))

    # Contract on the last axis of both operands (Q @ K^T without a transpose).
    contract_last = (((1,), (1,)), ((), ()))

    # Per-head attention; each head's output is stored directly at its lane
    # offset in a lane-dense (tq, h*d_v) VMEM scratch (no concatenate copies).
    for hi in range(h):                                   # static unroll
        q_h = q[:, hi * d_k:(hi + 1) * d_k].astype(compute_dtype)   # (tq, d_k)
        k_h = k[:, hi * d_k:(hi + 1) * d_k].astype(compute_dtype)   # (nk, d_k)
        v_h = v[:, hi * d_v:(hi + 1) * d_v].astype(compute_dtype)   # (nk, d_v)

        att = lax.dot_general(q_h, k_h, contract_last,
                              preferred_element_type=jnp.float32)   # (tq, nk)
        # Numerically stable softmax in f32; divide via EUP approx reciprocal.
        att = jnp.exp(att - jnp.max(att, axis=-1, keepdims=True))
        att = att * pl.reciprocal(jnp.sum(att, axis=-1, keepdims=True),
                                  approx=True)
        # TODO(synk): dropout(p=0.1) omitted — identity in eval mode; train
        # mode would need pltpu.prng_seed/prng_random_bits based masking.

        ctx_ref[:, hi * d_v:(hi + 1) * d_v] = jnp.dot(
            att.astype(compute_dtype), v_h, preferred_element_type=jnp.float32)

    # Output projection from the lane-dense context slab.
    out = jnp.dot(ctx_ref[...].astype(compute_dtype), wo_ref[...],
                  preferred_element_type=jnp.float32) + bo_ref[...]
    out_ref[...] = out.astype(out_ref.dtype)


def scaled_dot_product_attention(queries, keys, values, params, d_k, d_v, h,
                                 compute_dtype=jnp.bfloat16):
    b_s, nq, d_model = queries.shape
    nk = keys.shape[1]

    tile_nq = _choose_q_tile(nq)
    n_q_tiles = nq // tile_nq

    # Pre-transpose the weights to (in_features, out_features) and cast them
    # once to the MXU compute dtype outside the kernel.
    wq_t = params["wq"].T.astype(compute_dtype)
    wk_t = params["wk"].T.astype(compute_dtype)
    wv_t = params["wv"].T.astype(compute_dtype)
    wo_t = params["wo"].T.astype(compute_dtype)
    bq, bk, bv, bo = params["bq"], params["bk"], params["bv"], params["bo"]

    def w_spec(shape):
        # Constant block index across the whole (b, qi) grid -> weights stay
        # resident in VMEM after the first fetch (no per-step re-DMA).
        return pl.BlockSpec(shape, lambda b, qi: (0,) * len(shape))

    kernel = functools.partial(_sdpa_kernel, d_k, d_v, h, compute_dtype)

    return pl.pallas_call(
        kernel,
        out_shape=jax.ShapeDtypeStruct((b_s, nq, d_model), queries.dtype),
        grid_spec=pltpu.PrefetchScalarGridSpec(
            num_scalar_prefetch=0,
            grid=(b_s, n_q_tiles),
            in_specs=[
                # Leading batch block dim squeezed (None) -> 2-D refs in-kernel.
                pl.BlockSpec((None, tile_nq, d_model), lambda b, qi: (b, qi, 0)),
                pl.BlockSpec((None, nk, d_model), lambda b, qi: (b, 0, 0)),
                pl.BlockSpec((None, nk, d_model), lambda b, qi: (b, 0, 0)),
                w_spec(wq_t.shape), w_spec(bq.shape),
                w_spec(wk_t.shape), w_spec(bk.shape),
                w_spec(wv_t.shape), w_spec(bv.shape),
                w_spec(wo_t.shape), w_spec(bo.shape),
            ],
            out_specs=pl.BlockSpec((None, tile_nq, d_model),
                                   lambda b, qi: (b, qi, 0)),
            scratch_shapes=[pltpu.VMEM((tile_nq, h * d_v), jnp.float32)],
        ),
        compiler_params=pltpu.CompilerParams(
            dimension_semantics=("parallel", "parallel")),
    )(queries, keys, values,
      wq_t, bq, wk_t, bk, wv_t, bv, wo_t, bo)


def _reference(queries, keys, values, params, d_k, d_v, h):
    """Pure-JAX reference mirroring the PyTorch forward (eval mode)."""
    b_s, nq, d_model = queries.shape
    nk = keys.shape[1]
    q = (queries @ params["wq"].T + params["bq"][0]).reshape(b_s, nq, h, d_k).transpose(0, 2, 1, 3)
    k = (keys @ params["wk"].T + params["bk"][0]).reshape(b_s, nk, h, d_k).transpose(0, 2, 3, 1)
    v = (values @ params["wv"].T + params["bv"][0]).reshape(b_s, nk, h, d_v).transpose(0, 2, 1, 3)
    att = jnp.matmul(q, k) / np.sqrt(d_k)
    att = jax.nn.softmax(att, axis=-1)
    out = jnp.matmul(att, v).transpose(0, 2, 1, 3).reshape(b_s, nq, h * d_v)
    return out @ params["wo"].T + params["bo"][0]


if __name__ == "__main__":
    d_model, d_k, d_v, h = 32, 16, 16, 4
    b_s, nq, nk = 2, 8, 8

    key = jax.random.PRNGKey(0)
    kp, kq, kk, kv = jax.random.split(key, 4)
    params = make_params(kp, d_model, d_k, d_v, h)

    queries = jax.random.normal(kq, (b_s, nq, d_model), jnp.float32)
    keys = jax.random.normal(kk, (b_s, nk, d_model), jnp.float32)
    values = jax.random.normal(kv, (b_s, nk, d_model), jnp.float32)

    ref = _reference(queries, keys, values, params, d_k, d_v, h)

    # f32 MXU path (tolerance accounts for the EUP approximate reciprocal).
    out_f32 = scaled_dot_product_attention(queries, keys, values, params,
                                           d_k, d_v, h,
                                           compute_dtype=jnp.float32)
    out_f32 = jax.block_until_ready(out_f32)
    np.testing.assert_allclose(np.asarray(out_f32), np.asarray(ref),
                               rtol=1e-2, atol=1e-2)

    # bf16 MXU inputs / f32 accumulation — recommended setting on v6e/v7x.
    out_bf16 = scaled_dot_product_attention(queries, keys, values, params,
                                            d_k, d_v, h,
                                            compute_dtype=jnp.bfloat16)
    out_bf16 = jax.block_until_ready(out_bf16)
    np.testing.assert_allclose(np.asarray(out_bf16), np.asarray(ref),
                               rtol=5e-2, atol=5e-2)

    print("KERNEL_OK")
</pallas_src>

<mosaic_0001>
module attributes {stable_mosaic.version = 11 : i64} {
  func.func @_sdpa_kernel(%arg0: i32, %arg1: i32, %arg2: memref<1x8x32xf32, #tpu.memory_space<vmem>>, %arg3: memref<1x8x32xf32, #tpu.memory_space<vmem>>, %arg4: memref<1x8x32xf32, #tpu.memory_space<vmem>>, %arg5: memref<32x64xf32, #tpu.memory_space<vmem>>, %arg6: memref<1x64xf32, #tpu.memory_space<vmem>>, %arg7: memref<32x64xf32, #tpu.memory_space<vmem>>, %arg8: memref<1x64xf32, #tpu.memory_space<vmem>>, %arg9: memref<32x64xf32, #tpu.memory_space<vmem>>, %arg10: memref<1x64xf32, #tpu.memory_space<vmem>>, %arg11: memref<64x32xf32, #tpu.memory_space<vmem>>, %arg12: memref<1x32xf32, #tpu.memory_space<vmem>>, %arg13: memref<1x8x32xf32, #tpu.memory_space<vmem>>, %arg14: memref<8x64xf32, #tpu.memory_space<vmem>>) attributes {dimension_semantics = [#tpu.dimension_semantics<parallel>, #tpu.dimension_semantics<parallel>], iteration_bounds = array<i64: 2, 1>, scalar_prefetch = 0 : i64, scratch_operands = 1 : i64, tpu.core_type = #tpu.core_type<tc>, window_params = [{transform_indices = @transform_0, window_bounds = array<i64: 1, 8, 32>}, {transform_indices = @transform_1, window_bounds = array<i64: 1, 8, 32>}, {transform_indices = @transform_2, window_bounds = array<i64: 1, 8, 32>}, {pipeline_mode = #tpu.pipeline_mode<synchronous>, transform_indices = @transform_3, window_bounds = array<i64: 32, 64>}, {pipeline_mode = #tpu.pipeline_mode<synchronous>, transform_indices = @transform_4, window_bounds = array<i64: 1, 64>}, {pipeline_mode = #tpu.pipeline_mode<synchronous>, transform_indices = @transform_5, window_bounds = array<i64: 32, 64>}, {pipeline_mode = #tpu.pipeline_mode<synchronous>, transform_indices = @transform_6, window_bounds = array<i64: 1, 64>}, {pipeline_mode = #tpu.pipeline_mode<synchronous>, transform_indices = @transform_7, window_bounds = array<i64: 32, 64>}, {pipeline_mode = #tpu.pipeline_mode<synchronous>, transform_indices = @transform_8, window_bounds = array<i64: 1, 64>}, {pipeline_mode = #tpu.pipeline_mode<synchronous>, transform_indices = @transform_9, window_bounds = array<i64: 64, 32>}, {pipeline_mode = #tpu.pipeline_mode<synchronous>, transform_indices = @transform_10, window_bounds = array<i64: 1, 32>}, {transform_indices = @transform_11, window_bounds = array<i64: 1, 8, 32>}]} {
    %c0 = arith.constant 0 : index
    %c0_0 = arith.constant 0 : index
    %c0_1 = arith.constant 0 : index
    %0 = vector.load %arg2[%c0, %c0_0, %c0_1] : memref<1x8x32xf32, #tpu.memory_space<vmem>>, vector<1x8x32xf32>
    %1 = vector.shape_cast %0 : vector<1x8x32xf32> to vector<8x32xf32>
    %c0_2 = arith.constant 0 : index
    %c0_3 = arith.constant 0 : index
    %c0_4 = arith.constant 0 : index
    %2 = vector.load %arg3[%c0_2, %c0_3, %c0_4] : memref<1x8x32xf32, #tpu.memory_space<vmem>>, vector<1x8x32xf32>
    %3 = vector.shape_cast %2 : vector<1x8x32xf32> to vector<8x32xf32>
    %c0_5 = arith.constant 0 : index
    %c0_6 = arith.constant 0 : index
    %c0_7 = arith.constant 0 : index
    %4 = vector.load %arg4[%c0_5, %c0_6, %c0_7] : memref<1x8x32xf32, #tpu.memory_space<vmem>>, vector<1x8x32xf32>
    %5 = vector.shape_cast %4 : vector<1x8x32xf32> to vector<8x32xf32>
    %c0_8 = arith.constant 0 : index
    %c0_9 = arith.constant 0 : index
    %6 = vector.load %arg5[%c0_8, %c0_9] : memref<32x64xf32, #tpu.memory_space<vmem>>, vector<32x64xf32>
    %cst = arith.constant dense<0.000000e+00> : vector<8x64xf32>
    %7 = tpu.matmul %1, %6, %cst {dimension_numbers = #tpu.dot_dimension_numbers<[1], [0], [0], [1], [0, 0, 1, 1], [], []>} : vector<8x32xf32>, vector<32x64xf32>, vector<8x64xf32> -> vector<8x64xf32>
    %c0_10 = arith.constant 0 : index
    %c0_11 = arith.constant 0 : index
    %8 = vector.load %arg6[%c0_10, %c0_11] : memref<1x64xf32, #tpu.memory_space<vmem>>, vector<1x64xf32>
    %9 = vector.broadcast %8 : vector<1x64xf32> to vector<8x64xf32>
    %10 = arith.addf %7, %9 : vector<8x64xf32>
    %c0_12 = arith.constant 0 : index
    %c0_13 = arith.constant 0 : index
    %11 = vector.load %arg7[%c0_12, %c0_13] : memref<32x64xf32, #tpu.memory_space<vmem>>, vector<32x64xf32>
    %cst_14 = arith.constant dense<0.000000e+00> : vector<8x64xf32>
    %12 = tpu.matmul %3, %11, %cst_14 {dimension_numbers = #tpu.dot_dimension_numbers<[1], [0], [0], [1], [0, 0, 1, 1], [], []>} : vector<8x32xf32>, vector<32x64xf32>, vector<8x64xf32> -> vector<8x64xf32>
    %c0_15 = arith.constant 0 : index
    %c0_16 = arith.constant 0 : index
    %13 = vector.load %arg8[%c0_15, %c0_16] : memref<1x64xf32, #tpu.memory_space<vmem>>, vector<1x64xf32>
    %14 = vector.broadcast %13 : vector<1x64xf32> to vector<8x64xf32>
    %15 = arith.addf %12, %14 : vector<8x64xf32>
    %c0_17 = arith.constant 0 : index
    %c0_18 = arith.constant 0 : index
    %16 = vector.load %arg9[%c0_17, %c0_18] : memref<32x64xf32, #tpu.memory_space<vmem>>, vector<32x64xf32>
    %cst_19 = arith.constant dense<0.000000e+00> : vector<8x64xf32>
    %17 = tpu.matmul %5, %16, %cst_19 {dimension_numbers = #tpu.dot_dimension_numbers<[1], [0], [0], [1], [0, 0, 1, 1], [], []>} : vector<8x32xf32>, vector<32x64xf32>, vector<8x64xf32> -> vector<8x64xf32>
    %c0_20 = arith.constant 0 : index
    %c0_21 = arith.constant 0 : index
    %18 = vector.load %arg10[%c0_20, %c0_21] : memref<1x64xf32, #tpu.memory_space<vmem>>, vector<1x64xf32>
    %19 = vector.broadcast %18 : vector<1x64xf32> to vector<8x64xf32>
    %20 = arith.addf %17, %19 : vector<8x64xf32>
    %cst_22 = arith.constant 2.500000e-01 : f32
    %21 = vector.broadcast %cst_22 : f32 to vector<8x64xf32>
    %22 = arith.mulf %10, %21 : vector<8x64xf32>
    %23 = vector.extract_strided_slice %22 {offsets = [0, 0], sizes = [8, 16], strides = [1, 1]} : vector<8x64xf32> to vector<8x16xf32>
    %24 = vector.extract_strided_slice %15 {offsets = [0, 0], sizes = [8, 16], strides = [1, 1]} : vector<8x64xf32> to vector<8x16xf32>
    %25 = vector.extract_strided_slice %20 {offsets = [0, 0], sizes = [8, 16], strides = [1, 1]} : vector<8x64xf32> to vector<8x16xf32>
    %cst_23 = arith.constant dense<0.000000e+00> : vector<8x8xf32>
    %26 = tpu.matmul %23, %24, %cst_23 {dimension_numbers = #tpu.dot_dimension_numbers<[1], [1], [0], [0], [0, 0, 1, 0], [], []>} : vector<8x16xf32>, vector<8x16xf32>, vector<8x8xf32> -> vector<8x8xf32>
    %cst_24 = arith.constant dense<0xFF800000> : vector<8xf32>
    %27 = vector.multi_reduction <maximumf>, %26, %cst_24 [1] : vector<8x8xf32> to vector<8xf32>
    %28 = vector.shape_cast %27 : vector<8xf32> to vector<8x1xf32>
    %29 = vector.broadcast %28 : vector<8x1xf32> to vector<8x8xf32>
    %30 = arith.subf %26, %29 : vector<8x8xf32>
    %31 = math.exp %30 : vector<8x8xf32>
    %cst_25 = arith.constant dense<0.000000e+00> : vector<8xf32>
    %32 = vector.multi_reduction <add>, %31, %cst_25 [1] : vector<8x8xf32> to vector<8xf32>
    %33 = vector.shape_cast %32 : vector<8xf32> to vector<8x1xf32>
    %34 = tpu.reciprocal %33 {approx = true} : vector<8x1xf32> -> vector<8x1xf32>
    %35 = vector.broadcast %34 : vector<8x1xf32> to vector<8x8xf32>
    %36 = arith.mulf %31, %35 : vector<8x8xf32>
    %cst_26 = arith.constant dense<0.000000e+00> : vector<8x16xf32>
    %37 = tpu.matmul %36, %25, %cst_26 {dimension_numbers = #tpu.dot_dimension_numbers<[1], [0], [0], [1], [0, 0, 1, 1], [], []>} : vector<8x8xf32>, vector<8x16xf32>, vector<8x16xf32> -> vector<8x16xf32>
    %c0_27 = arith.constant 0 : index
    %c0_28 = arith.constant 0 : index
    %38 = vector.load %arg14[%c0_27, %c0_28] : memref<8x64xf32, #tpu.memory_space<vmem>>, vector<8x16xf32>
    tpu.vector_store %arg14[%c0_27, %c0_28], %37 {strides = array<i32>} : memref<8x64xf32, #tpu.memory_space<vmem>>, vector<8x16xf32>,
    %39 = vector.extract_strided_slice %22 {offsets = [0, 16], sizes = [8, 16], strides = [1, 1]} : vector<8x64xf32> to vector<8x16xf32>
    %40 = vector.extract_strided_slice %15 {offsets = [0, 16], sizes = [8, 16], strides = [1, 1]} : vector<8x64xf32> to vector<8x16xf32>
    %41 = vector.extract_strided_slice %20 {offsets = [0, 16], sizes = [8, 16], strides = [1, 1]} : vector<8x64xf32> to vector<8x16xf32>
    %cst_29 = arith.constant dense<0.000000e+00> : vector<8x8xf32>
    %42 = tpu.matmul %39, %40, %cst_29 {dimension_numbers = #tpu.dot_dimension_numbers<[1], [1], [0], [0], [0, 0, 1, 0], [], []>} : vector<8x16xf32>, vector<8x16xf32>, vector<8x8xf32> -> vector<8x8xf32>
    %cst_30 = arith.constant dense<0xFF800000> : vector<8xf32>
    %43 = vector.multi_reduction <maximumf>, %42, %cst_30 [1] : vector<8x8xf32> to vector<8xf32>
    %44 = vector.shape_cast %43 : vector<8xf32> to vector<8x1xf32>
    %45 = vector.broadcast %44 : vector<8x1xf32> to vector<8x8xf32>
    %46 = arith.subf %42, %45 : vector<8x8xf32>
    %47 = math.exp %46 : vector<8x8xf32>
    %cst_31 = arith.constant dense<0.000000e+00> : vector<8xf32>
    %48 = vector.multi_reduction <add>, %47, %cst_31 [1] : vector<8x8xf32> to vector<8xf32>
    %49 = vector.shape_cast %48 : vector<8xf32> to vector<8x1xf32>
    %50 = tpu.reciprocal %49 {approx = true} : vector<8x1xf32> -> vector<8x1xf32>
    %51 = vector.broadcast %50 : vector<8x1xf32> to vector<8x8xf32>
    %52 = arith.mulf %47, %51 : vector<8x8xf32>
    %cst_32 = arith.constant dense<0.000000e+00> : vector<8x16xf32>
    %53 = tpu.matmul %52, %41, %cst_32 {dimension_numbers = #tpu.dot_dimension_numbers<[1], [0], [0], [1], [0, 0, 1, 1], [], []>} : vector<8x8xf32>, vector<8x16xf32>, vector<8x16xf32> -> vector<8x16xf32>
    %c0_33 = arith.constant 0 : index
    %c16 = arith.constant 16 : index
    %54 = vector.load %arg14[%c0_33, %c16] : memref<8x64xf32, #tpu.memory_space<vmem>>, vector<8x16xf32>
    tpu.vector_store %arg14[%c0_33, %c16], %53 {strides = array<i32>} : memref<8x64xf32, #tpu.memory_space<vmem>>, vector<8x16xf32>,
    %55 = vector.extract_strided_slice %22 {offsets = [0, 32], sizes = [8, 16], strides = [1, 1]} : vector<8x64xf32> to vector<8x16xf32>
    %56 = vector.extract_strided_slice %15 {offsets = [0, 32], sizes = [8, 16], strides = [1, 1]} : vector<8x64xf32> to vector<8x16xf32>
    %57 = vector.extract_strided_slice %20 {offsets = [0, 32], sizes = [8, 16], strides = [1, 1]} : vector<8x64xf32> to vector<8x16xf32>
    %cst_34 = arith.constant dense<0.000000e+00> : vector<8x8xf32>
    %58 = tpu.matmul %55, %56, %cst_34 {dimension_numbers = #tpu.dot_dimension_numbers<[1], [1], [0], [0], [0, 0, 1, 0], [], []>} : vector<8x16xf32>, vector<8x16xf32>, vector<8x8xf32> -> vector<8x8xf32>
    %cst_35 = arith.constant dense<0xFF800000> : vector<8xf32>
    %59 = vector.multi_reduction <maximumf>, %58, %cst_35 [1] : vector<8x8xf32> to vector<8xf32>
    %60 = vector.shape_cast %59 : vector<8xf32> to vector<8x1xf32>
    %61 = vector.broadcast %60 : vector<8x1xf32> to vector<8x8xf32>
    %62 = arith.subf %58, %61 : vector<8x8xf32>
    %63 = math.exp %62 : vector<8x8xf32>
    %cst_36 = arith.constant dense<0.000000e+00> : vector<8xf32>
    %64 = vector.multi_reduction <add>, %63, %cst_36 [1] : vector<8x8xf32> to vector<8xf32>
    %65 = vector.shape_cast %64 : vector<8xf32> to vector<8x1xf32>
    %66 = tpu.reciprocal %65 {approx = true} : vector<8x1xf32> -> vector<8x1xf32>
    %67 = vector.broadcast %66 : vector<8x1xf32> to vector<8x8xf32>
    %68 = arith.mulf %63, %67 : vector<8x8xf32>
    %cst_37 = arith.constant dense<0.000000e+00> : vector<8x16xf32>
    %69 = tpu.matmul %68, %57, %cst_37 {dimension_numbers = #tpu.dot_dimension_numbers<[1], [0], [0], [1], [0, 0, 1, 1], [], []>} : vector<8x8xf32>, vector<8x16xf32>, vector<8x16xf32> -> vector<8x16xf32>
    %c0_38 = arith.constant 0 : index
    %c32 = arith.constant 32 : index
    %70 = vector.load %arg14[%c0_38, %c32] : memref<8x64xf32, #tpu.memory_space<vmem>>, vector<8x16xf32>
    tpu.vector_store %arg14[%c0_38, %c32], %69 {strides = array<i32>} : memref<8x64xf32, #tpu.memory_space<vmem>>, vector<8x16xf32>,
    %71 = vector.extract_strided_slice %22 {offsets = [0, 48], sizes = [8, 16], strides = [1, 1]} : vector<8x64xf32> to vector<8x16xf32>
    %72 = vector.extract_strided_slice %15 {offsets = [0, 48], sizes = [8, 16], strides = [1, 1]} : vector<8x64xf32> to vector<8x16xf32>
    %73 = vector.extract_strided_slice %20 {offsets = [0, 48], sizes = [8, 16], strides = [1, 1]} : vector<8x64xf32> to vector<8x16xf32>
    %cst_39 = arith.constant dense<0.000000e+00> : vector<8x8xf32>
    %74 = tpu.matmul %71, %72, %cst_39 {dimension_numbers = #tpu.dot_dimension_numbers<[1], [1], [0], [0], [0, 0, 1, 0], [], []>} : vector<8x16xf32>, vector<8x16xf32>, vector<8x8xf32> -> vector<8x8xf32>
    %cst_40 = arith.constant dense<0xFF800000> : vector<8xf32>
    %75 = vector.multi_reduction <maximumf>, %74, %cst_40 [1] : vector<8x8xf32> to vector<8xf32>
    %76 = vector.shape_cast %75 : vector<8xf32> to vector<8x1xf32>
    %77 = vector.broadcast %76 : vector<8x1xf32> to vector<8x8xf32>
    %78 = arith.subf %74, %77 : vector<8x8xf32>
    %79 = math.exp %78 : vector<8x8xf32>
    %cst_41 = arith.constant dense<0.000000e+00> : vector<8xf32>
    %80 = vector.multi_reduction <add>, %79, %cst_41 [1] : vector<8x8xf32> to vector<8xf32>
    %81 = vector.shape_cast %80 : vector<8xf32> to vector<8x1xf32>
    %82 = tpu.reciprocal %81 {approx = true} : vector<8x1xf32> -> vector<8x1xf32>
    %83 = vector.broadcast %82 : vector<8x1xf32> to vector<8x8xf32>
    %84 = arith.mulf %79, %83 : vector<8x8xf32>
    %cst_42 = arith.constant dense<0.000000e+00> : vector<8x16xf32>
    %85 = tpu.matmul %84, %73, %cst_42 {dimension_numbers = #tpu.dot_dimension_numbers<[1], [0], [0], [1], [0, 0, 1, 1], [], []>} : vector<8x8xf32>, vector<8x16xf32>, vector<8x16xf32> -> vector<8x16xf32>
    %c0_43 = arith.constant 0 : index
    %c48 = arith.constant 48 : index
    %86 = vector.load %arg14[%c0_43, %c48] : memref<8x64xf32, #tpu.memory_space<vmem>>, vector<8x16xf32>
    tpu.vector_store %arg14[%c0_43, %c48], %85 {strides = array<i32>} : memref<8x64xf32, #tpu.memory_space<vmem>>, vector<8x16xf32>,
    %c0_44 = arith.constant 0 : index
    %c0_45 = arith.constant 0 : index
    %87 = vector.load %arg14[%c0_44, %c0_45] : memref<8x64xf32, #tpu.memory_space<vmem>>, vector<8x64xf32>
    %c0_46 = arith.constant 0 : index
    %c0_47 = arith.constant 0 : index
    %88 = vector.load %arg11[%c0_46, %c0_47] : memref<64x32xf32, #tpu.memory_space<vmem>>, vector<64x32xf32>
    %cst_48 = arith.constant dense<0.000000e+00> : vector<8x32xf32>
    %89 = tpu.matmul %87, %88, %cst_48 {dimension_numbers = #tpu.dot_dimension_numbers<[1], [0], [0], [1], [0, 0, 1, 1], [], []>} : vector<8x64xf32>, vector<64x32xf32>, vector<8x32xf32> -> vector<8x32xf32>
    %c0_49 = arith.constant 0 : index
    %c0_50 = arith.constant 0 : index
    %90 = vector.load %arg12[%c0_49, %c0_50] : memref<1x32xf32, #tpu.memory_space<vmem>>, vector<1x32xf32>
    %91 = vector.broadcast %90 : vector<1x32xf32> to vector<8x32xf32>
    %92 = arith.addf %89, %91 : vector<8x32xf32>
    %c0_51 = arith.constant 0 : index
    %c0_52 = arith.constant 0 : index
    %c0_53 = arith.constant 0 : index
    %93 = vector.load %arg13[%c0_51, %c0_52, %c0_53] : memref<1x8x32xf32, #tpu.memory_space<vmem>>, vector<1x8x32xf32>
    %94 = vector.shape_cast %93 : vector<1x8x32xf32> to vector<8x32xf32>
    %95 = vector.shape_cast %92 : vector<8x32xf32> to vector<1x8x32xf32>
    tpu.vector_store %arg13[%c0_51, %c0_52, %c0_53], %95 {strides = array<i32>} : memref<1x8x32xf32, #tpu.memory_space<vmem>>, vector<1x8x32xf32>,
    return
  }
  func.func @transform_0(%arg0: i32, %arg1: i32) -> (i32, i32, i32) {
    %c0_i32 = arith.constant 0 : i32
    %c0_i32_0 = arith.constant 0 : i32
    return %arg0, %arg1, %c0_i32 : i32, i32, i32
  }
  func.func @transform_1(%arg0: i32, %arg1: i32) -> (i32, i32, i32) {
    %c0_i32 = arith.constant 0 : i32
    %c0_i32_0 = arith.constant 0 : i32
    %c0_i32_1 = arith.constant 0 : i32
    return %arg0, %c0_i32, %c0_i32_0 : i32, i32, i32
  }
  func.func @transform_2(%arg0: i32, %arg1: i32) -> (i32, i32, i32) {
    %c0_i32 = arith.constant 0 : i32
    %c0_i32_0 = arith.constant 0 : i32
    %c0_i32_1 = arith.constant 0 : i32
    return %arg0, %c0_i32, %c0_i32_0 : i32, i32, i32
  }
  func.func @transform_3(%arg0: i32, %arg1: i32) -> (i32, i32) {
    %c0_i32 = arith.constant 0 : i32
    %c0_i32_0 = arith.constant 0 : i32
    %c0_i32_1 = arith.constant 0 : i32
    return %c0_i32, %c0_i32_0 : i32, i32
  }
  func.func @transform_4(%arg0: i32, %arg1: i32) -> (i32, i32) {
    %c0_i32 = arith.constant 0 : i32
    %c0_i32_0 = arith.constant 0 : i32
    %c0_i32_1 = arith.constant 0 : i32
    return %c0_i32, %c0_i32_0 : i32, i32
  }
  func.func @transform_5(%arg0: i32, %arg1: i32) -> (i32, i32) {
    %c0_i32 = arith.constant 0 : i32
    %c0_i32_0 = arith.constant 0 : i32
    %c0_i32_1 = arith.constant 0 : i32
    return %c0_i32, %c0_i32_0 : i32, i32
  }
  func.func @transform_6(%arg0: i32, %arg1: i32) -> (i32, i32) {
    %c0_i32 = arith.constant 0 : i32
    %c0_i32_0 = arith.constant 0 : i32
    %c0_i32_1 = arith.constant 0 : i32
    return %c0_i32, %c0_i32_0 : i32, i32
  }
  func.func @transform_7(%arg0: i32, %arg1: i32) -> (i32, i32) {
    %c0_i32 = arith.constant 0 : i32
    %c0_i32_0 = arith.constant 0 : i32
    %c0_i32_1 = arith.constant 0 : i32
    return %c0_i32, %c0_i32_0 : i32, i32
  }
  func.func @transform_8(%arg0: i32, %arg1: i32) -> (i32, i32) {
    %c0_i32 = arith.constant 0 : i32
    %c0_i32_0 = arith.constant 0 : i32
    %c0_i32_1 = arith.constant 0 : i32
    return %c0_i32, %c0_i32_0 : i32, i32
  }
  func.func @transform_9(%arg0: i32, %arg1: i32) -> (i32, i32) {
    %c0_i32 = arith.constant 0 : i32
    %c0_i32_0 = arith.constant 0 : i32
    %c0_i32_1 = arith.constant 0 : i32
    return %c0_i32, %c0_i32_0 : i32, i32
  }
  func.func @transform_10(%arg0: i32, %arg1: i32) -> (i32, i32) {
    %c0_i32 = arith.constant 0 : i32
    %c0_i32_0 = arith.constant 0 : i32
    %c0_i32_1 = arith.constant 0 : i32
    return %c0_i32, %c0_i32_0 : i32, i32
  }
  func.func @transform_11(%arg0: i32, %arg1: i32) -> (i32, i32, i32) {
    %c0_i32 = arith.constant 0 : i32
    %c0_i32_0 = arith.constant 0 : i32
    return %arg0, %arg1, %c0_i32 : i32, i32, i32
  }
}

</mosaic_0001>

<llo_original>
// kernel: tpu_custom_call.1
$region0: #{tpu_custom_call.1}
  #allocation0 [shape = 'u32[]', space=smem, size = 0x4, offset = 0x4, fixed_abs, tag = 'smem constant byte address 0x4 - core index']
  #allocation1 [shape = 'u32[144,128]{1,0:T(1,128)}', space=vmem, size = 0x12000, scoped, tag = 'internal scratch']
  #allocation2 [shape = 'f32[8,64]{1,0:T(8,128)}', space=vmem, size = 0x1000, scoped, tag = 'scratch operand']
  %s0 = inlined_call_operand.hbm [shape: f32[2,8,32], index: 0, kind: input, shape index: {}]
  %s1 = inlined_call_operand.hbm [shape: f32[2,8,32], index: 1, kind: input, shape index: {}]
  %s2 = inlined_call_operand.hbm [shape: f32[2,8,32], index: 2, kind: input, shape index: {}]
  %s3 = inlined_call_operand.vmem [shape: f32[32,64], index: 3, kind: input, shape index: {}]
  %s4 = inlined_call_operand.vmem [shape: f32[1,64], index: 4, kind: input, shape index: {}]
  %s5 = inlined_call_operand.vmem [shape: f32[32,64], index: 5, kind: input, shape index: {}]
  %s6 = inlined_call_operand.vmem [shape: f32[1,64], index: 6, kind: input, shape index: {}]
  %s7 = inlined_call_operand.vmem [shape: f32[32,64], index: 7, kind: input, shape index: {}]
  %s8 = inlined_call_operand.hbm [shape: f32[1,64], index: 8, kind: input, shape index: {}]
  %s9 = inlined_call_operand.vmem [shape: f32[64,32], index: 9, kind: input, shape index: {}]
  %s10 = inlined_call_operand.vmem [shape: f32[1,32], index: 10, kind: input, shape index: {}]
  %s11 = inlined_call_operand.hbm [shape: f32[2,8,32], index: 11, kind: output, shape index: {}]
  %s12 = sld [smem:[#allocation0]]
  $region93: #{tpu_custom_call.1} parent=0
    _
  %s14 = ssub.s32 1, %s12
  %s15 = scalar_select 0, %s14, %s12
  $region1: #{tpu_custom_call.1} parent=0
    #allocation3 [shape = 'u8[8192]{0}', space=vmem, size = 0x2000, scoped, tag = 'input window, operand 0']
    #allocation4 [shape = 's32[2]{0}', space=sflag, size = 0x8, scoped, tag = 'scoped memory for tpu_custom_call.1']
    #allocation5 [shape = 's32[2]{0}', space=sflag, size = 0x8, scoped, tag = 'scoped memory for tpu_custom_call.1']
    #allocation6 [shape = 'u8[8192]{0}', space=vmem, size = 0x2000, scoped, tag = 'input window, operand 1']
    #allocation7 [shape = 's32[2]{0}', space=sflag, size = 0x8, scoped, tag = 'scoped memory for tpu_custom_call.1']
    #allocation8 [shape = 'u8[8192]{0}', space=vmem, size = 0x2000, scoped, tag = 'input window, operand 2']
    #allocation9 [shape = 'u8[512]{0}', space=vmem, size = 0x400, scoped, tag = 'input window, operand 8, single buffered']
    #allocation10 [shape = 's32[1]{0}', space=sflag, size = 0x4, scoped, tag = 'scoped memory for tpu_custom_call.1']
    #allocation11 [shape = 'u8[8192]{0}', space=vmem, size = 0x2000, scoped, tag = 'output window, operand 0']
    %16 = vsyncpa [#allocation4], 0
    %s17 = scalar_lea.sflag [#allocation4], 1
    %18 = vsyncpa %s17, 0
    %19 = vsyncpa [#allocation7], 0
    %s20 = scalar_lea.sflag [#allocation7], 1
    %21 = vsyncpa %s20, 0
    %22 = vsyncpa [#allocation10], 0
    %23 = vsyncpa [#allocation5], 0
    %s24 = scalar_lea.sflag [#allocation5], 1
    %25 = vsyncpa %s24, 0
    loop: start=0, step=1, limit=4
    $region2: #{tpu_custom_call.1} parent=1 // loop_pre_header
      _
    $region3: #{tpu_custom_call.1} parent=1 // loop_header
      %s27 = sphi 0, %s31
      %p28 = scmp.ge.s32.totalorder %s27, 4
      %s34 = sphi 0, %s46
      %s35 = sphi 0, %s42
      %s36 = sphi 0, %s34
      %s37 = sphi 0, %s35
      %s38 = sphi 0, %s36
      %s39 = sphi 0, %s37
      %s51 = sphi 0, %s53
      %s54 = sphi 0, %s51
      %s55 = sphi 0, %s54
      %s71 = sphi 0, %s55
      %s77 = sphi 0, %s79
      %s80 = sphi 0, %s77
      %s81 = sphi 0, %s80
      %s97 = sphi 0, %s81
      %s103 = sphi 0, %s105
      %s106 = sphi 0, %s103
      %s107 = sphi 0, %s106
      %s123 = sphi 0, %s107
      %s127 = sphi 0, %s127
      %s129 = sphi 0, %s127
      %s130 = sphi 0, %s129
      %s144 = sphi 0, %s130
      %s148 = sphi 0, %s148
      %s150 = sphi 0, %s148
      %s151 = sphi 0, %s150
      %s165 = sphi 0, %s151
      %s169 = sphi 0, %s169
      %s171 = sphi 0, %s169
      %s172 = sphi 0, %s171
      %s186 = sphi 0, %s172
      %s190 = sphi 0, %s190
      %s192 = sphi 0, %s190
      %s193 = sphi 0, %s192
      %s207 = sphi 0, %s193
      %s211 = sphi 0, %s211
      %s213 = sphi 0, %s211
      %s214 = sphi 0, %s213
      %s228 = sphi 0, %s214
      %s232 = sphi 0, %s232
      %s234 = sphi 0, %s232
      %s235 = sphi 0, %s234
      %s249 = sphi 0, %s235
      %s253 = sphi 0, %s253
      %s255 = sphi 0, %s253
      %s256 = sphi 0, %s255
      %s270 = sphi 0, %s256
      %s274 = sphi 0, %s274
      %s276 = sphi 0, %s274
      %s277 = sphi 0, %s276
      %s291 = sphi 0, %s277
      %s299 = sphi 0, %s301
      %s302 = sphi 0, %s299
      %s303 = sphi 0, %s302
      %s319 = sphi 0, %s303
    $region4: #{tpu_custom_call.1} parent=1 // loop_header_branch
      %30 = sbr.rel (%p28) target = $region8
    $region5: #{tpu_custom_call.1} parent=1 // loop_body
      %s32 = ssub.s32 %s27, 1
      %s33 = ssub.s32 %s27, 2
      %s40 = sadd.s32 1, %s35
      %p41 = scmp.ge.s32.totalorder %s40, 1
      %s42 = scalar_select %p41, 0, %s40
      %s43 = sadd.s32 1, %s34
      %s44 = scalar_select %p41, %s43, %s34
      %p45 = scmp.ge.s32.totalorder %s44, 2
      %s46 = scalar_select %p45, 0, %s44
      %s47 = ssub.s32 %s34, %s46
      %s48 = ssub.s32 %s35, %s42
      %s49 = sor.u32 %s47, %s48
      %p50 = scmp.eq.s32.totalorder %s49, 0
      %s52 = sadd.s32 %s51, 1
      %s53 = scalar_select %p50, %s51, %s52
      %p56 = pneg %p50
      %p57 = scmp.eq.s32.totalorder %s27, 1
      %p58 = por %p56, %p57
      %p59 = scmp.ne.s32.totalorder %s51, %s54
      %p60 = scmp.eq.s32.totalorder %s27, 0
      %p61 = por %p59, %p60
      %p62 = scmp.ne.s32.totalorder %s51, %s54
      %p63 = scmp.eq.s32.totalorder %s32, 1
      %p64 = por %p62, %p63
      %p65 = scmp.ne.s32.totalorder %s54, %s55
      %p66 = scmp.eq.s32.totalorder %s32, 0
      %p67 = por %p65, %p66
      %p68 = scmp.ne.s32.totalorder %s54, %s55
      %p69 = scmp.eq.s32.totalorder %s33, 1
      %p70 = por %p68, %p69
      %p72 = scmp.ne.s32.totalorder %s55, %s71
      %p73 = scmp.eq.s32.totalorder %s33, 0
      %p74 = por %p72, %p73
      %s75 = ssub.s32 %s34, %s46
      %p76 = scmp.eq.s32.totalorder %s75, 0
      %s78 = sadd.s32 %s77, 1
      %s79 = scalar_select %p76, %s77, %s78
      %p82 = pneg %p76
      %p83 = scmp.eq.s32.totalorder %s27, 1
      %p84 = por %p82, %p83
      %p85 = scmp.ne.s32.totalorder %s77, %s80
      %p86 = scmp.eq.s32.totalorder %s27, 0
      %p87 = por %p85, %p86
      %p88 = scmp.ne.s32.totalorder %s77, %s80
      %p89 = scmp.eq.s32.totalorder %s32, 1
      %p90 = por %p88, %p89
      %p91 = scmp.ne.s32.totalorder %s80, %s81
      %p92 = scmp.eq.s32.totalorder %s32, 0
      %p93 = por %p91, %p92
      %p94 = scmp.ne.s32.totalorder %s80, %s81
      %p95 = scmp.eq.s32.totalorder %s33, 1
      %p96 = por %p94, %p95
      %p98 = scmp.ne.s32.totalorder %s81, %s97
      %p99 = scmp.eq.s32.totalorder %s33, 0
      %p100 = por %p98, %p99
      %s101 = ssub.s32 %s34, %s46
      %p102 = scmp.eq.s32.totalorder %s101, 0
      %s104 = sadd.s32 %s103, 1
      %s105 = scalar_select %p102, %s103, %s104
      %p108 = pneg %p102
      %p109 = scmp.eq.s32.totalorder %s27, 1
      %p110 = por %p108, %p109
      %p111 = scmp.ne.s32.totalorder %s103, %s106
      %p112 = scmp.eq.s32.totalorder %s27, 0
      %p113 = por %p111, %p112
      %p114 = scmp.ne.s32.totalorder %s103, %s106
      %p115 = scmp.eq.s32.totalorder %s32, 1
      %p116 = por %p114, %p115
      %p117 = scmp.ne.s32.totalorder %s106, %s107
      %p118 = scmp.eq.s32.totalorder %s32, 0
      %p119 = por %p117, %p118
      %p120 = scmp.ne.s32.totalorder %s106, %s107
      %p121 = scmp.eq.s32.totalorder %s33, 1
      %p122 = por %p120, %p121
      %p124 = scmp.ne.s32.totalorder %s107, %s123
      %p125 = scmp.eq.s32.totalorder %s33, 0
      %p126 = por %p124, %p125
      %s128 = sadd.s32 %s127, 1
      %p131 = scmp.eq.s32.totalorder %s27, 1
      %p132 = scmp.ne.s32.totalorder %s127, %s129
      %p133 = scmp.eq.s32.totalorder %s27, 0
      %p134 = por %p132, %p133
      %p135 = scmp.ne.s32.totalorder %s127, %s129
      %p136 = scmp.eq.s32.totalorder %s32, 1
      %p137 = por %p135, %p136
      %p138 = scmp.ne.s32.totalorder %s129, %s130
      %p139 = scmp.eq.s32.totalorder %s32, 0
      %p140 = por %p138, %p139
      %p141 = scmp.ne.s32.totalorder %s129, %s130
      %p142 = scmp.eq.s32.totalorder %s33, 1
      %p143 = por %p141, %p142
      %p145 = scmp.ne.s32.totalorder %s130, %s144
      %p146 = scmp.eq.s32.totalorder %s33, 0
      %p147 = por %p145, %p146
      %s149 = sadd.s32 %s148, 1
      %p152 = scmp.eq.s32.totalorder %s27, 1
      %p153 = scmp.ne.s32.totalorder %s148, %s150
      %p154 = scmp.eq.s32.totalorder %s27, 0
      %p155 = por %p153, %p154
      %p156 = scmp.ne.s32.totalorder %s148, %s150
      %p157 = scmp.eq.s32.totalorder %s32, 1
      %p158 = por %p156, %p157
      %p159 = scmp.ne.s32.totalorder %s150, %s151
      %p160 = scmp.eq.s32.totalorder %s32, 0
      %p161 = por %p159, %p160
      %p162 = scmp.ne.s32.totalorder %s150, %s151
      %p163 = scmp.eq.s32.totalorder %s33, 1
      %p164 = por %p162, %p163
      %p166 = scmp.ne.s32.totalorder %s151, %s165
      %p167 = scmp.eq.s32.totalorder %s33, 0
      %p168 = por %p166, %p167
      %s170 = sadd.s32 %s169, 1
      %p173 = scmp.eq.s32.totalorder %s27, 1
      %p174 = scmp.ne.s32.totalorder %s169, %s171
      %p175 = scmp.eq.s32.totalorder %s27, 0
      %p176 = por %p174, %p175
      %p177 = scmp.ne.s32.totalorder %s169, %s171
      %p178 = scmp.eq.s32.totalorder %s32, 1
      %p179 = por %p177, %p178
      %p180 = scmp.ne.s32.totalorder %s171, %s172
      %p181 = scmp.eq.s32.totalorder %s32, 0
      %p182 = por %p180, %p181
      %p183 = scmp.ne.s32.totalorder %s171, %s172
      %p184 = scmp.eq.s32.totalorder %s33, 1
      %p185 = por %p183, %p184
      %p187 = scmp.ne.s32.totalorder %s172, %s186
      %p188 = scmp.eq.s32.totalorder %s33, 0
      %p189 = por %p187, %p188
      %s191 = sadd.s32 %s190, 1
      %p194 = scmp.eq.s32.totalorder %s27, 1
      %p195 = scmp.ne.s32.totalorder %s190, %s192
      %p196 = scmp.eq.s32.totalorder %s27, 0
      %p197 = por %p195, %p196
      %p198 = scmp.ne.s32.totalorder %s190, %s192
      %p199 = scmp.eq.s32.totalorder %s32, 1
      %p200 = por %p198, %p199
      %p201 = scmp.ne.s32.totalorder %s192, %s193
      %p202 = scmp.eq.s32.totalorder %s32, 0
      %p203 = por %p201, %p202
      %p204 = scmp.ne.s32.totalorder %s192, %s193
      %p205 = scmp.eq.s32.totalorder %s33, 1
      %p206 = por %p204, %p205
      %p208 = scmp.ne.s32.totalorder %s193, %s207
      %p209 = scmp.eq.s32.totalorder %s33, 0
      %p210 = por %p208, %p209
      %s212 = sadd.s32 %s211, 1
      %p215 = scmp.eq.s32.totalorder %s27, 1
      %p216 = scmp.ne.s32.totalorder %s211, %s213
      %p217 = scmp.eq.s32.totalorder %s27, 0
      %p218 = por %p216, %p217
      %p219 = scmp.ne.s32.totalorder %s211, %s213
      %p220 = scmp.eq.s32.totalorder %s32, 1
      %p221 = por %p219, %p220
      %p222 = scmp.ne.s32.totalorder %s213, %s214
      %p223 = scmp.eq.s32.totalorder %s32, 0
      %p224 = por %p222, %p223
      %p225 = scmp.ne.s32.totalorder %s213, %s214
      %p226 = scmp.eq.s32.totalorder %s33, 1
      %p227 = por %p225, %p226
      %p229 = scmp.ne.s32.totalorder %s214, %s228
      %p230 = scmp.eq.s32.totalorder %s33, 0
      %p231 = por %p229, %p230
      %s233 = sadd.s32 %s232, 1
      %p236 = scmp.eq.s32.totalorder %s27, 1
      %p237 = scmp.ne.s32.totalorder %s232, %s234
      %p238 = scmp.eq.s32.totalorder %s27, 0
      %p239 = por %p237, %p238
      %p240 = scmp.ne.s32.totalorder %s232, %s234
      %p241 = scmp.eq.s32.totalorder %s32, 1
      %p242 = por %p240, %p241
      %p243 = scmp.ne.s32.totalorder %s234, %s235
      %p244 = scmp.eq.s32.totalorder %s32, 0
      %p245 = por %p243, %p244
      %p246 = scmp.ne.s32.totalorder %s234, %s235
      %p247 = scmp.eq.s32.totalorder %s33, 1
      %p248 = por %p246, %p247
      %p250 = scmp.ne.s32.totalorder %s235, %s249
      %p251 = scmp.eq.s32.totalorder %s33, 0
      %p252 = por %p250, %p251
      %s254 = sadd.s32 %s253, 1
      %p257 = scmp.eq.s32.totalorder %s27, 1
      %p258 = scmp.ne.s32.totalorder %s253, %s255
      %p259 = scmp.eq.s32.totalorder %s27, 0
      %p260 = por %p258, %p259
      %p261 = scmp.ne.s32.totalorder %s253, %s255
      %p262 = scmp.eq.s32.totalorder %s32, 1
      %p263 = por %p261, %p262
      %p264 = scmp.ne.s32.totalorder %s255, %s256
      %p265 = scmp.eq.s32.totalorder %s32, 0
      %p266 = por %p264, %p265
      %p267 = scmp.ne.s32.totalorder %s255, %s256
      %p268 = scmp.eq.s32.totalorder %s33, 1
      %p269 = por %p267, %p268
      %p271 = scmp.ne.s32.totalorder %s256, %s270
      %p272 = scmp.eq.s32.totalorder %s33, 0
      %p273 = por %p271, %p272
      %s275 = sadd.s32 %s274, 1
      %p278 = scmp.eq.s32.totalorder %s27, 1
      %p279 = scmp.ne.s32.totalorder %s274, %s276
      %p280 = scmp.eq.s32.totalorder %s27, 0
      %p281 = por %p279, %p280
      %p282 = scmp.ne.s32.totalorder %s274, %s276
      %p283 = scmp.eq.s32.totalorder %s32, 1
      %p284 = por %p282, %p283
      %p285 = scmp.ne.s32.totalorder %s276, %s277
      %p286 = scmp.eq.s32.totalorder %s32, 0
      %p287 = por %p285, %p286
      %p288 = scmp.ne.s32.totalorder %s276, %s277
      %p289 = scmp.eq.s32.totalorder %s33, 1
      %p290 = por %p288, %p289
      %p292 = scmp.ne.s32.totalorder %s277, %s291
      %p293 = scmp.eq.s32.totalorder %s33, 0
      %p294 = por %p292, %p293
      %s295 = ssub.s32 %s34, %s46
      %s296 = ssub.s32 %s35, %s42
      %s297 = sor.u32 %s295, %s296
      %p298 = scmp.eq.s32.totalorder %s297, 0
      %s300 = sadd.s32 %s299, 1
      %s301 = scalar_select %p298, %s299, %s300
      %p304 = pneg %p298
      %p305 = scmp.eq.s32.totalorder %s27, 1
      %p306 = por %p304, %p305
      %p307 = scmp.ne.s32.totalorder %s299, %s302
      %p308 = scmp.eq.s32.totalorder %s27, 0
      %p309 = por %p307, %p308
      %p310 = scmp.ne.s32.totalorder %s299, %s302
      %p311 = scmp.eq.s32.totalorder %s32, 1
      %p312 = por %p310, %p311
      %p313 = scmp.ne.s32.totalorder %s302, %s303
      %p314 = scmp.eq.s32.totalorder %s32, 0
      %p315 = por %p313, %p314
      %p316 = scmp.ne.s32.totalorder %s302, %s303
      %p317 = scmp.eq.s32.totalorder %s33, 1
      %p318 = por %p316, %p317
      %p320 = scmp.ne.s32.totalorder %s303, %s319
      %p321 = scmp.eq.s32.totalorder %s33, 0
      %p322 = por %p320, %p321
      %p323 = scmp.le.s32.totalorder 1, %s27
      %p324 = scmp.lt.s32.totalorder %s27, 3
      %p325 = pnand %p323, %p324
      %p326 = pneg %p325
      // Predicated region
      $region9: #{tpu_custom_call.1} parent=5 // pred_check
        _
      $region10: #{tpu_custom_call.1} parent=5 // pred_check_branch
        %328 = sbr.rel (%p325) target = $region12
      $region11: #{tpu_custom_call.1} parent=5 // pred_region
        %s329 = ssub.s32 %s27, 1
        // Predicated region
        $region13: #{tpu_custom_call.1} parent=11 // pred_check
          %p330 = pneg %p140
        $region14: #{tpu_custom_call.1} parent=11 // pred_check_branch
          %332 = sbr.rel (%p330) target = $region16
        $region15: #{tpu_custom_call.1} parent=11 // pred_region
          _
        $region16: #{tpu_custom_call.1} parent=11 // pred_fallthru
          _
        // Predicated region
        $region17: #{tpu_custom_call.1} parent=11 // pred_check
          %p333 = pneg %p161
        $region18: #{tpu_custom_call.1} parent=11 // pred_check_branch
          %335 = sbr.rel (%p333) target = $region20
        $region19: #{tpu_custom_call.1} parent=11 // pred_region
          _
        $region20: #{tpu_custom_call.1} parent=11 // pred_fallthru
          _
        // Predicated region
        $region21: #{tpu_custom_call.1} parent=11 // pred_check
          %p336 = pneg %p182
        $region22: #{tpu_custom_call.1} parent=11 // pred_check_branch
          %338 = sbr.rel (%p336) target = $region24
        $region23: #{tpu_custom_call.1} parent=11 // pred_region
          _
        $region24: #{tpu_custom_call.1} parent=11 // pred_fallthru
          _
        // Predicated region
        $region25: #{tpu_custom_call.1} parent=11 // pred_check
          %p339 = pneg %p203
        $region26: #{tpu_custom_call.1} parent=11 // pred_check_branch
          %341 = sbr.rel (%p339) target = $region28
        $region27: #{tpu_custom_call.1} parent=11 // pred_region
          _
        $region28: #{tpu_custom_call.1} parent=11 // pred_fallthru
          _
        // Predicated region
        $region29: #{tpu_custom_call.1} parent=11 // pred_check
          %p342 = pneg %p224
        $region30: #{tpu_custom_call.1} parent=11 // pred_check_branch
          %344 = sbr.rel (%p342) target = $region32
        $region31: #{tpu_custom_call.1} parent=11 // pred_region
          _
        $region32: #{tpu_custom_call.1} parent=11 // pred_fallthru
          _
        // Predicated region
        $region33: #{tpu_custom_call.1} parent=11 // pred_check
          %p345 = pneg %p245
        $region34: #{tpu_custom_call.1} parent=11 // pred_check_branch
          %347 = sbr.rel (%p345) target = $region36
        $region35: #{tpu_custom_call.1} parent=11 // pred_region
          %s349 = ssub.s32 16, 16
          %350 = vsyncadd [#allocation10], %s349
          %s352 = sshll.u32 [#allocation9], 4
          %s353 = int_to_ptr.vmem [resolvable:$true] %s352
          %355 = dma.hbm_to_vmem [thread:$0]  %s8, 16, %s353, [#allocation10]
        $region36: #{tpu_custom_call.1} parent=11 // pred_fallthru
          _
        // Predicated region
        $region37: #{tpu_custom_call.1} parent=11 // pred_check
          %p356 = pneg %p266
        $region38: #{tpu_custom_call.1} parent=11 // pred_check_branch
          %358 = sbr.rel (%p356) target = $region40
        $region39: #{tpu_custom_call.1} parent=11 // pred_region
          _
        $region40: #{tpu_custom_call.1} parent=11 // pred_fallthru
          _
        // Predicated region
        $region41: #{tpu_custom_call.1} parent=11 // pred_check
          %p359 = pneg %p287
        $region42: #{tpu_custom_call.1} parent=11 // pred_check_branch
          %361 = sbr.rel (%p359) target = $region44
        $region43: #{tpu_custom_call.1} parent=11 // pred_region
          _
        $region44: #{tpu_custom_call.1} parent=11 // pred_fallthru
          _
      $region12: #{tpu_custom_call.1} parent=5 // pred_fallthru
        _
      %p362 = scmp.lt.s32.totalorder %s27, 2
      // Predicated region
      $region45: #{tpu_custom_call.1} parent=5 // pred_check
        %p363 = pneg %p362
      $region46: #{tpu_custom_call.1} parent=5 // pred_check_branch
        %365 = sbr.rel (%p363) target = $region48
      $region47: #{tpu_custom_call.1} parent=5 // pred_region
        // Predicated region
        $region49: #{tpu_custom_call.1} parent=47 // pred_check
          %p366 = pneg %p61
        $region50: #{tpu_custom_call.1} parent=47 // pred_check_branch
          %368 = sbr.rel (%p366) target = $region52
        $region51: #{tpu_custom_call.1} parent=47 // pred_region
          %s369 = sand.u32 %s51, 1
          %s370 = scalar_lea.sflag [#allocation4], %s369
          %s371 = sand.u32 %s51, 1
          %s372 = smul.addr %s371, 8
          %s373 = scalar_lea.vmem [#allocation3], %s372
          %s375 = ssub.s32 128, 128
          %376 = vsyncadd %s370, %s375
          %s377 = sadd.s32 %s35, %s34
          %s378 = smul.addr %s377, 128
          %s379 = scalar_lea.hbm %s0, %s378
          %s381 = sshll.u32 %s373, 4
          %s382 = int_to_ptr.vmem [resolvable:$true] %s381
          %384 = dma.hbm_to_vmem [thread:$0]  %s379, 128, %s382, %s370
        $region52: #{tpu_custom_call.1} parent=47 // pred_fallthru
          _
        // Predicated region
        $region53: #{tpu_custom_call.1} parent=47 // pred_check
          %p385 = pneg %p87
        $region54: #{tpu_custom_call.1} parent=47 // pred_check_branch
          %387 = sbr.rel (%p385) target = $region56
        $region55: #{tpu_custom_call.1} parent=47 // pred_region
          %s388 = sand.u32 %s27, 1
          %s389 = scalar_lea.sflag [#allocation7], %s388
          %s390 = sand.u32 %s77, 1
          %s391 = smul.addr %s390, 8
          %s392 = scalar_lea.vmem [#allocation6], %s391
          %s394 = ssub.s32 128, 128
          %395 = vsyncadd %s389, %s394
          %s396 = smul.addr %s34, 128
          %s397 = scalar_lea.hbm %s1, %s396
          %s399 = sshll.u32 %s392, 4
          %s400 = int_to_ptr.vmem [resolvable:$true] %s399
          %402 = dma.hbm_to_vmem [thread:$0]  %s397, 128, %s400, %s389
        $region56: #{tpu_custom_call.1} parent=47 // pred_fallthru
          _
        // Predicated region
        $region57: #{tpu_custom_call.1} parent=47 // pred_check
          %p403 = pneg %p113
        $region58: #{tpu_custom_call.1} parent=47 // pred_check_branch
          %405 = sbr.rel (%p403) target = $region60
        $region59: #{tpu_custom_call.1} parent=47 // pred_region
          %s406 = sand.u32 %s27, 1
          %s407 = scalar_lea.sflag [#allocation7], %s406
          %s408 = sand.u32 %s103, 1
          %s409 = smul.addr %s408, 8
          %s410 = scalar_lea.vmem [#allocation8], %s409
          %s412 = ssub.s32 128, 128
          %413 = vsyncadd %s407, %s412
          %s414 = smul.addr %s34, 128
          %s415 = scalar_lea.hbm %s2, %s414
          %s417 = sshll.u32 %s410, 4
          %s418 = int_to_ptr.vmem [resolvable:$true] %s417
          %420 = dma.hbm_to_vmem [thread:$0]  %s415, 128, %s418, %s407
        $region60: #{tpu_custom_call.1} parent=47 // pred_fallthru
          _
      $region48: #{tpu_custom_call.1} parent=5 // pred_fallthru
        _
      %p421 = scmp.le.s32.totalorder 1, %s27
      %p422 = scmp.lt.s32.totalorder %s27, 3
      %p423 = pnand %p421, %p422
      %p424 = pneg %p423
      // Predicated region
      $region61: #{tpu_custom_call.1} parent=5 // pred_check
        _
      $region62: #{tpu_custom_call.1} parent=5 // pred_check_branch
        %426 = sbr.rel (%p423) target = $region64
      $region63: #{tpu_custom_call.1} parent=5 // pred_region
        %s427 = ssub.s32 %s27, 1
        %s428 = sand.u32 %s54, 1
        %s429 = scalar_lea.sflag [#allocation4], %s428
        %s430 = sand.u32 %s54, 1
        %s431 = smul.addr %s430, 8
        %s432 = scalar_lea.vmem [#allocation3], %s431
        // Predicated region
        $region65: #{tpu_custom_call.1} parent=63 // pred_check
          %p433 = pneg %p67
        $region66: #{tpu_custom_call.1} parent=63 // pred_check_branch
          %435 = sbr.rel (%p433) target = $region68
        $region67: #{tpu_custom_call.1} parent=63 // pred_region
          %436 = dma.done %s429, 128
        $region68: #{tpu_custom_call.1} parent=63 // pred_fallthru
          _
        %s437 = sand.u32 %s32, 1
        %s438 = scalar_lea.sflag [#allocation7], %s437
        %s439 = sand.u32 %s80, 1
        %s440 = smul.addr %s439, 8
        %s441 = scalar_lea.vmem [#allocation6], %s440
        // Predicated region
        $region69: #{tpu_custom_call.1} parent=63 // pred_check
          %p442 = pneg %p93
        $region70: #{tpu_custom_call.1} parent=63 // pred_check_branch
          %444 = sbr.rel (%p442) target = $region72
        $region71: #{tpu_custom_call.1} parent=63 // pred_region
          %445 = dma.done %s438, 128
        $region72: #{tpu_custom_call.1} parent=63 // pred_fallthru
          _
        %s446 = sand.u32 %s32, 1
        %s447 = scalar_lea.sflag [#allocation7], %s446
        %s448 = sand.u32 %s106, 1
        %s449 = smul.addr %s448, 8
        %s450 = scalar_lea.vmem [#allocation8], %s449
        // Predicated region
        $region73: #{tpu_custom_call.1} parent=63 // pred_check
          %p451 = pneg %p119
        $region74: #{tpu_custom_call.1} parent=63 // pred_check_branch
          %453 = sbr.rel (%p451) target = $region76
        $region75: #{tpu_custom_call.1} parent=63 // pred_region
          %454 = dma.done %s447, 128
        $region76: #{tpu_custom_call.1} parent=63 // pred_fallthru
          _
        // Predicated region
        $region77: #{tpu_custom_call.1} parent=63 // pred_check
          %p455 = pneg %p245
        $region78: #{tpu_custom_call.1} parent=63 // pred_check_branch
          %457 = sbr.rel (%p455) target = $region80
        $region79: #{tpu_custom_call.1} parent=63 // pred_region
          %458 = dma.done [#allocation10], 16
        $region80: #{tpu_custom_call.1} parent=63 // pred_fallthru
          _
        %s459 = sand.u32 %s54, 1
        %s460 = scalar_lea.sflag [#allocation4], %s459
        %s461 = sand.u32 %s54, 1
        %s462 = smul.addr %s461, 8
        %s463 = scalar_lea.vmem [#allocation3], %s462
        %p464 = pneg %p67
        %p465 = pneg %p64
        %s466 = sand.u32 %s32, 1
        %s467 = scalar_lea.sflag [#allocation7], %s466
        %s468 = sand.u32 %s80, 1
        %s469 = smul.addr %s468, 8
        %s470 = scalar_lea.vmem [#allocation6], %s469
        %p471 = pneg %p93
        %p472 = pneg %p90
        %s473 = sand.u32 %s32, 1
        %s474 = scalar_lea.sflag [#allocation7], %s473
        %s475 = sand.u32 %s106, 1
        %s476 = smul.addr %s475, 8
        %s477 = scalar_lea.vmem [#allocation8], %s476
        %p478 = pneg %p119
        %p479 = pneg %p116
        %p480 = pneg %p140
        %p481 = pneg %p137
        %p482 = pneg %p161
        %p483 = pneg %p158
        %p484 = pneg %p182
        %p485 = pneg %p179
        %p486 = pneg %p203
        %p487 = pneg %p200
        %p488 = pneg %p224
        %p489 = pneg %p221
        %p490 = pneg %p245
        %p491 = pneg %p242
        %p492 = pneg %p266
        %p493 = pneg %p263
        %p494 = pneg %p287
        %p495 = pneg %p284
        %p496 = pneg %p315
        %p497 = pneg %p312
        %s498 = sand.u32 %s302, 1
        %s499 = scalar_lea.sflag [#allocation5], %s498
        %s500 = sand.u32 %s302, 1
        %s501 = smul.addr %s500, 8
        %s502 = scalar_lea.vmem [#allocation11], %s501
        %v503 = vld [vmem:[%s432] sm:$0xff]
        %v504 = vld [vmem:[%s441] sm:$0xff]
        %v505 = vld [vmem:[%s450] sm:$0xff]
        %v506 = vld [vmem:[%s3] sm:$0xff]
        %v507 = vld [vmem:[%s3 + $0x8] sm:$0xff]
        %v508 = vld [vmem:[%s3 + $0x10] sm:$0xff]
        %v509 = vld [vmem:[%s3 + $0x18] sm:$0xff]
        %v510 = vld [vmem:[%s4] sm:$0x1]
        %v512 = vlaneseq
        %v513 = vshrl.u32 %v512, 7
        %v514 = vsub.s32 0, %v513
        %v515 = vrot.slane %v510, %v514
        %vm517 = vcmask 261120
        %v519 = vsel %vm517, %v503, 0
        %521 = vmatprep.subr.mxu0 0.0
        %522 = vmatpush1.msra.mxu0 %v506
        %523 = vmatprep.subr.mxu0 0.0
        %524 = vmatpush1.msra.mxu0 %v507
        %525 = vmatprep.subr.mxu0 0.0
        %526 = vmatpush1.msra.mxu0 %v508
        %527 = vmatprep.subr.mxu0 0.0
        %528 = vmatpush1.msra.mxu0 %v509
        %529 = vmatprep.subr.mxu0 0.0
        %530 = vmatpush1.msra.mxu0 0.0
        %531 = vmatprep.subr.mxu0 0.0
        %532 = vmatpush1.msra.mxu0 0.0
        %533 = vmatprep.subr.mxu0 0.0
        %534 = vmatpush1.msra.mxu0 0.0
        %535 = vmatprep.subr.mxu0 0.0
        %536 = vmatpush1.msra.mxu0 0.0
        %537 = vmatprep.subr.mxu0 0.0
        %538 = vmatpush1.msra.mxu0 0.0
        %539 = vmatprep.subr.mxu0 0.0
        %540 = vmatpush1.msra.mxu0 0.0
        %541 = vmatprep.subr.mxu0 0.0
        %542 = vmatpush1.msra.mxu0 0.0
        %543 = vmatprep.subr.mxu0 0.0
        %544 = vmatpush1.msra.mxu0 0.0
        %545 = vmatprep.subr.mxu0 0.0
        %546 = vmatpush1.msra.mxu0 0.0
        %547 = vmatprep.subr.mxu0 0.0
        %548 = vmatpush1.msra.mxu0 0.0
        %549 = vmatprep.subr.mxu0 0.0
        %550 = vmatpush1.msra.mxu0 0.0
        %551 = vmatprep.subr.mxu0 0.0
        %552 = vmatpush1.msra.mxu0 0.0
        %553 = vmatprep.subr.mxu0 0.0
        %554 = vmatpush1.msra.mxu0 0.0
        %555 = vmatprep.subr.mxu0 0.0
        %556 = vmatpush1.msra.mxu0 0.0
        %557 = vmatprep.subr.mxu0 0.0
        %558 = vmatpush1.msra.mxu0 0.0
        %559 = vmatprep.subr.mxu0 0.0
        %560 = vmatpush1.msra.mxu0 0.0
        %561 = vmatprep.subr.mxu0 0.0
        %562 = vmatpush1.msra.mxu0 0.0
        %563 = vmatprep.subr.mxu0 0.0
        %564 = vmatpush1.msra.mxu0 0.0
        %565 = vmatprep.subr.mxu0 0.0
        %566 = vmatpush1.msra.mxu0 0.0
        %567 = vmatprep.subr.mxu0 0.0
        %568 = vmatpush1.msra.mxu0 0.0
        %569 = vmatprep.subr.mxu0 0.0
        %570 = vmatpush1.msra.mxu0 0.0
        %571 = vmatprep.subr.mxu0 0.0
        %572 = vmatpush1.msra.mxu0 0.0
        %573 = vmatprep.subr.mxu0 0.0
        %574 = vmatpush1.msra.mxu0 0.0
        %575 = vmatprep.subr.mxu0 0.0
        %576 = vmatpush1.msra.mxu0 0.0
        %577 = vmatprep.subr.mxu0 0.0
        %578 = vmatpush1.msra.mxu0 0.0
        %579 = vmatprep.subr.mxu0 0.0
        %580 = vmatpush1.msra.mxu0 0.0
        %581 = vmatprep.subr.mxu0 0.0
        %582 = vmatpush1.msra.mxu0 0.0
        %583 = vmatprep.subr.mxu0 0.0
        %584 = vmatpush1.msra.mxu0 0.0
        %585 = vmatprep.mubr.f32.mxu0 0.0
        %586 = vmatmul.mubr.f32.gmra.mrb[0].mxu0 %v519
        %v587 = vpop.f32.mrb[0].mxu0
        %v588 = vadd.f32 %v515, %v587
        %v589 = vpop.f32.mrb[0].mxu0
        %590 = vdwg.mxu0
        %v591 = vld [vmem:[%s5] sm:$0xff]
        %v592 = vld [vmem:[%s5 + $0x8] sm:$0xff]
        %v593 = vld [vmem:[%s5 + $0x10] sm:$0xff]
        %v594 = vld [vmem:[%s5 + $0x18] sm:$0xff]
        %v595 = vld [vmem:[%s6] sm:$0x1]
        %v597 = vlaneseq
        %v598 = vshrl.u32 %v597, 7
        %v599 = vsub.s32 0, %v598
        %v600 = vrot.slane %v595, %v599
        %v603 = vsel %vm517, %v504, 0
        %605 = vmatprep.subr.mxu0 0.0
        %606 = vmatpush1.msra.mxu0 %v591
        %607 = vmatprep.subr.mxu0 0.0
        %608 = vmatpush1.msra.mxu0 %v592
        %609 = vmatprep.subr.mxu0 0.0
        %610 = vmatpush1.msra.mxu0 %v593
        %611 = vmatprep.subr.mxu0 0.0
        %612 = vmatpush1.msra.mxu0 %v594
        %613 = vmatprep.subr.mxu0 0.0
        %614 = vmatpush1.msra.mxu0 0.0
        %615 = vmatprep.subr.mxu0 0.0
        %616 = vmatpush1.msra.mxu0 0.0
        %617 = vmatprep.subr.mxu0 0.0
        %618 = vmatpush1.msra.mxu0 0.0
        %619 = vmatprep.subr.mxu0 0.0
        %620 = vmatpush1.msra.mxu0 0.0
        %621 = vmatprep.subr.mxu0 0.0
        %622 = vmatpush1.msra.mxu0 0.0
        %623 = vmatprep.subr.mxu0 0.0
        %624 = vmatpush1.msra.mxu0 0.0
        %625 = vmatprep.subr.mxu0 0.0
        %626 = vmatpush1.msra.mxu0 0.0
        %627 = vmatprep.subr.mxu0 0.0
        %628 = vmatpush1.msra.mxu0 0.0
        %629 = vmatprep.subr.mxu0 0.0
        %630 = vmatpush1.msra.mxu0 0.0
        %631 = vmatprep.subr.mxu0 0.0
        %632 = vmatpush1.msra.mxu0 0.0
        %633 = vmatprep.subr.mxu0 0.0
        %634 = vmatpush1.msra.mxu0 0.0
        %635 = vmatprep.subr.mxu0 0.0
        %636 = vmatpush1.msra.mxu0 0.0
        %637 = vmatprep.subr.mxu0 0.0
        %638 = vmatpush1.msra.mxu0 0.0
        %639 = vmatprep.subr.mxu0 0.0
        %640 = vmatpush1.msra.mxu0 0.0
        %641 = vmatprep.subr.mxu0 0.0
        %642 = vmatpush1.msra.mxu0 0.0
        %643 = vmatprep.subr.mxu0 0.0
        %644 = vmatpush1.msra.mxu0 0.0
        %645 = vmatprep.subr.mxu0 0.0
        %646 = vmatpush1.msra.mxu0 0.0
        %647 = vmatprep.subr.mxu0 0.0
        %648 = vmatpush1.msra.mxu0 0.0
        %649 = vmatprep.subr.mxu0 0.0
        %650 = vmatpush1.msra.mxu0 0.0
        %651 = vmatprep.subr.mxu0 0.0
        %652 = vmatpush1.msra.mxu0 0.0
        %653 = vmatprep.subr.mxu0 0.0
        %654 = vmatpush1.msra.mxu0 0.0
        %655 = vmatprep.subr.mxu0 0.0
        %656 = vmatpush1.msra.mxu0 0.0
        %657 = vmatprep.subr.mxu0 0.0
        %658 = vmatpush1.msra.mxu0 0.0
        %659 = vmatprep.subr.mxu0 0.0
        %660 = vmatpush1.msra.mxu0 0.0
        %661 = vmatprep.subr.mxu0 0.0
        %662 = vmatpush1.msra.mxu0 0.0
        %663 = vmatprep.subr.mxu0 0.0
        %664 = vmatpush1.msra.mxu0 0.0
        %665 = vmatprep.subr.mxu0 0.0
        %666 = vmatpush1.msra.mxu0 0.0
        %667 = vmatprep.subr.mxu0 0.0
        %668 = vmatpush1.msra.mxu0 0.0
        %669 = vmatprep.mubr.f32.mxu0 0.0
        %670 = vmatmul.mubr.f32.gmra.mrb[0].mxu0 %v603
        %v671 = vpop.f32.mrb[0].mxu0
        %v672 = vadd.f32 %v600, %v671
        %v673 = vpop.f32.mrb[0].mxu0
        %674 = vdwg.mxu0
        %v675 = vld [vmem:[%s7] sm:$0xff]
        %v676 = vld [vmem:[%s7 + $0x8] sm:$0xff]
        %v677 = vld [vmem:[%s7 + $0x10] sm:$0xff]
        %v678 = vld [vmem:[%s7 + $0x18] sm:$0xff]
        %v679 = vld [vmem:[#allocation9] sm:$0x1]
        %v681 = vlaneseq
        %v682 = vshrl.u32 %v681, 7
        %v683 = vsub.s32 0, %v682
        %v684 = vrot.slane %v679, %v683
        %v687 = vsel %vm517, %v505, 0
        %689 = vmatprep.subr.mxu0 0.0
        %690 = vmatpush1.msra.mxu0 %v675
        %691 = vmatprep.subr.mxu0 0.0
        %692 = vmatpush1.msra.mxu0 %v676
        %693 = vmatprep.subr.mxu0 0.0
        %694 = vmatpush1.msra.mxu0 %v677
        %695 = vmatprep.subr.mxu0 0.0
        %696 = vmatpush1.msra.mxu0 %v678
        %697 = vmatprep.subr.mxu0 0.0
        %698 = vmatpush1.msra.mxu0 0.0
        %699 = vmatprep.subr.mxu0 0.0
        %700 = vmatpush1.msra.mxu0 0.0
        %701 = vmatprep.subr.mxu0 0.0
        %702 = vmatpush1.msra.mxu0 0.0
        %703 = vmatprep.subr.mxu0 0.0
        %704 = vmatpush1.msra.mxu0 0.0
        %705 = vmatprep.subr.mxu0 0.0
        %706 = vmatpush1.msra.mxu0 0.0
        %707 = vmatprep.subr.mxu0 0.0
        %708 = vmatpush1.msra.mxu0 0.0
        %709 = vmatprep.subr.mxu0 0.0
        %710 = vmatpush1.msra.mxu0 0.0
        %711 = vmatprep.subr.mxu0 0.0
        %712 = vmatpush1.msra.mxu0 0.0
        %713 = vmatprep.subr.mxu0 0.0
        %714 = vmatpush1.msra.mxu0 0.0
        %715 = vmatprep.subr.mxu0 0.0
        %716 = vmatpush1.msra.mxu0 0.0
        %717 = vmatprep.subr.mxu0 0.0
        %718 = vmatpush1.msra.mxu0 0.0
        %719 = vmatprep.subr.mxu0 0.0
        %720 = vmatpush1.msra.mxu0 0.0
        %721 = vmatprep.subr.mxu0 0.0
        %722 = vmatpush1.msra.mxu0 0.0
        %723 = vmatprep.subr.mxu0 0.0
        %724 = vmatpush1.msra.mxu0 0.0
        %725 = vmatprep.subr.mxu0 0.0
        %726 = vmatpush1.msra.mxu0 0.0
        %727 = vmatprep.subr.mxu0 0.0
        %728 = vmatpush1.msra.mxu0 0.0
        %729 = vmatprep.subr.mxu0 0.0
        %730 = vmatpush1.msra.mxu0 0.0
        %731 = vmatprep.subr.mxu0 0.0
        %732 = vmatpush1.msra.mxu0 0.0
        %733 = vmatprep.subr.mxu0 0.0
        %734 = vmatpush1.msra.mxu0 0.0
        %735 = vmatprep.subr.mxu0 0.0
        %736 = vmatpush1.msra.mxu0 0.0
        %737 = vmatprep.subr.mxu0 0.0
        %738 = vmatpush1.msra.mxu0 0.0
        %739 = vmatprep.subr.mxu0 0.0
        %740 = vmatpush1.msra.mxu0 0.0
        %741 = vmatprep.subr.mxu0 0.0
        %742 = vmatpush1.msra.mxu0 0.0
        %743 = vmatprep.subr.mxu0 0.0
        %744 = vmatpush1.msra.mxu0 0.0
        %745 = vmatprep.subr.mxu0 0.0
        %746 = vmatpush1.msra.mxu0 0.0
        %747 = vmatprep.subr.mxu0 0.0
        %748 = vmatpush1.msra.mxu0 0.0
        %749 = vmatprep.subr.mxu0 0.0
        %750 = vmatpush1.msra.mxu0 0.0
        %751 = vmatprep.subr.mxu0 0.0
        %752 = vmatpush1.msra.mxu0 0.0
        %753 = vmatprep.mubr.f32.mxu0 0.0
        %754 = vmatmul.mubr.f32.gmra.mrb[0].mxu0 %v687
        %v755 = vpop.f32.mrb[0].mxu0
        %v756 = vadd.f32 %v684, %v755
        %v757 = vpop.f32.mrb[0].mxu0
        %758 = vdwg.mxu0
        %v759 = vmul.f32 %v588, 0.25
        %vm760 = vcmask 130048
        %v762 = vsel %vm760, %v759, 0
        %v765 = vsel %vm760, %v672, 0
        %767 = vmatprep.subr.mxu0 0.0
        %768 = vmatpush1.xpose.msra.mxu0 %v765
        %769 = vmatprep.subr.mxu0 0.0
        %770 = vmatpush1.xpose.msra.mxu0 0.0
        %771 = vmatprep.subr.mxu0 0.0
        %772 = vmatpush1.xpose.msra.mxu0 0.0
        %773 = vmatprep.subr.mxu0 0.0
        %774 = vmatpush1.xpose.msra.mxu0 0.0
        %775 = vmatprep.subr.mxu0 0.0
        %776 = vmatpush1.xpose.msra.mxu0 0.0
        %777 = vmatprep.subr.mxu0 0.0
        %778 = vmatpush1.xpose.msra.mxu0 0.0
        %779 = vmatprep.subr.mxu0 0.0
        %780 = vmatpush1.xpose.msra.mxu0 0.0
        %781 = vmatprep.subr.mxu0 0.0
        %782 = vmatpush1.xpose.msra.mxu0 0.0
        %783 = vmatprep.subr.mxu0 0.0
        %784 = vmatpush1.xpose.msra.mxu0 0.0
        %785 = vmatprep.subr.mxu0 0.0
        %786 = vmatpush1.xpose.msra.mxu0 0.0
        %787 = vmatprep.subr.mxu0 0.0
        %788 = vmatpush1.xpose.msra.mxu0 0.0
        %789 = vmatprep.subr.mxu0 0.0
        %790 = vmatpush1.xpose.msra.mxu0 0.0
        %791 = vmatprep.subr.mxu0 0.0
        %792 = vmatpush1.xpose.msra.mxu0 0.0
        %793 = vmatprep.subr.mxu0 0.0
        %794 = vmatpush1.xpose.msra.mxu0 0.0
        %795 = vmatprep.subr.mxu0 0.0
        %796 = vmatpush1.xpose.msra.mxu0 0.0
        %797 = vmatprep.subr.mxu0 0.0
        %798 = vmatpush1.xpose.msra.mxu0 0.0
        %799 = vmatprep.subr.mxu0 0.0
        %800 = vmatpush1.xpose.msra.mxu0 0.0
        %801 = vmatprep.subr.mxu0 0.0
        %802 = vmatpush1.xpose.msra.mxu0 0.0
        %803 = vmatprep.subr.mxu0 0.0
        %804 = vmatpush1.xpose.msra.mxu0 0.0
        %805 = vmatprep.subr.mxu0 0.0
        %806 = vmatpush1.xpose.msra.mxu0 0.0
        %807 = vmatprep.subr.mxu0 0.0
        %808 = vmatpush1.xpose.msra.mxu0 0.0
        %809 = vmatprep.subr.mxu0 0.0
        %810 = vmatpush1.xpose.msra.mxu0 0.0
        %811 = vmatprep.subr.mxu0 0.0
        %812 = vmatpush1.xpose.msra.mxu0 0.0
        %813 = vmatprep.subr.mxu0 0.0
        %814 = vmatpush1.xpose.msra.mxu0 0.0
        %815 = vmatprep.subr.mxu0 0.0
        %816 = vmatpush1.xpose.msra.mxu0 0.0
        %817 = vmatprep.subr.mxu0 0.0
        %818 = vmatpush1.xpose.msra.mxu0 0.0
        %819 = vmatprep.subr.mxu0 0.0
        %820 = vmatpush1.xpose.msra.mxu0 0.0
        %821 = vmatprep.subr.mxu0 0.0
        %822 = vmatpush1.xpose.msra.mxu0 0.0
        %823 = vmatprep.subr.mxu0 0.0
        %824 = vmatpush1.xpose.msra.mxu0 0.0
        %825 = vmatprep.subr.mxu0 0.0
        %826 = vmatpush1.xpose.msra.mxu0 0.0
        %827 = vmatprep.subr.mxu0 0.0
        %828 = vmatpush1.xpose.msra.mxu0 0.0
        %829 = vmatprep.subr.mxu0 0.0
        %830 = vmatpush1.xpose.msra.mxu0 0.0
        %831 = vmatprep.mubr.f32.mxu0 0.0
        %832 = vmatmul.mubr.f32.gmra.mrb[0].mxu0 %v762
        %v833 = vpop.f32.mrb[0].mxu0
        %v834 = vadd.f32 0.0, %v833
        %v835 = vpop.f32.mrb[0].mxu0
        %836 = vdwg.mxu0
        %vm837 = vcmask 64512
        %v838 = vsel %vm837, %v834, -inf
        %839 = vmax.xlane.f32.xlu0 %v838
        %v840 = vpop.xlane.xlu0 %839
        %v841 = vsub.f32 %v834, %v840
        %v842 = vmul.f32 %v841, 1.442695
        %v843 = vpow.pop %v842
        %v844 = vsel %vm837, %v843, 0.0
        %845 = vadd.xlane.f32.xlu0 %v844
        %v846 = vpop.xlane.xlu0 %845
        %v847 = vrcp.pop %v846
        %v848 = vmul.f32 %v843, %v847
        %v850 = vsel %vm837, %v848, 0
        %852 = vmatprep.subr.mxu0 0.0
        %853 = vmatpush1.msra.mxu0 %v756
        %854 = vmatprep.subr.mxu0 0.0
        %855 = vmatpush1.msra.mxu0 0.0
        %856 = vmatprep.subr.mxu0 0.0
        %857 = vmatpush1.msra.mxu0 0.0
        %858 = vmatprep.subr.mxu0 0.0
        %859 = vmatpush1.msra.mxu0 0.0
        %860 = vmatprep.subr.mxu0 0.0
        %861 = vmatpush1.msra.mxu0 0.0
        %862 = vmatprep.subr.mxu0 0.0
        %863 = vmatpush1.msra.mxu0 0.0
        %864 = vmatprep.subr.mxu0 0.0
        %865 = vmatpush1.msra.mxu0 0.0
        %866 = vmatprep.subr.mxu0 0.0
        %867 = vmatpush1.msra.mxu0 0.0
        %868 = vmatprep.subr.mxu0 0.0
        %869 = vmatpush1.msra.mxu0 0.0
        %870 = vmatprep.subr.mxu0 0.0
        %871 = vmatpush1.msra.mxu0 0.0
        %872 = vmatprep.subr.mxu0 0.0
        %873 = vmatpush1.msra.mxu0 0.0
        %874 = vmatprep.subr.mxu0 0.0
        %875 = vmatpush1.msra.mxu0 0.0
        %876 = vmatprep.subr.mxu0 0.0
        %877 = vmatpush1.msra.mxu0 0.0
        %878 = vmatprep.subr.mxu0 0.0
        %879 = vmatpush1.msra.mxu0 0.0
        %880 = vmatprep.subr.mxu0 0.0
        %881 = vmatpush1.msra.mxu0 0.0
        %882 = vmatprep.subr.mxu0 0.0
        %883 = vmatpush1.msra.mxu0 0.0
        %884 = vmatprep.subr.mxu0 0.0
        %885 = vmatpush1.msra.mxu0 0.0
        %886 = vmatprep.subr.mxu0 0.0
        %887 = vmatpush1.msra.mxu0 0.0
        %888 = vmatprep.subr.mxu0 0.0
        %889 = vmatpush1.msra.mxu0 0.0
        %890 = vmatprep.subr.mxu0 0.0
        %891 = vmatpush1.msra.mxu0 0.0
        %892 = vmatprep.subr.mxu0 0.0
        %893 = vmatpush1.msra.mxu0 0.0
        %894 = vmatprep.subr.mxu0 0.0
        %895 = vmatpush1.msra.mxu0 0.0
        %896 = vmatprep.subr.mxu0 0.0
        %897 = vmatpush1.msra.mxu0 0.0
        %898 = vmatprep.subr.mxu0 0.0
        %899 = vmatpush1.msra.mxu0 0.0
        %900 = vmatprep.subr.mxu0 0.0
        %901 = vmatpush1.msra.mxu0 0.0
        %902 = vmatprep.subr.mxu0 0.0
        %903 = vmatpush1.msra.mxu0 0.0
        %904 = vmatprep.subr.mxu0 0.0
        %905 = vmatpush1.msra.mxu0 0.0
        %906 = vmatprep.subr.mxu0 0.0
        %907 = vmatpush1.msra.mxu0 0.0
        %908 = vmatprep.subr.mxu0 0.0
        %909 = vmatpush1.msra.mxu0 0.0
        %910 = vmatprep.subr.mxu0 0.0
        %911 = vmatpush1.msra.mxu0 0.0
        %912 = vmatprep.subr.mxu0 0.0
        %913 = vmatpush1.msra.mxu0 0.0
        %914 = vmatprep.subr.mxu0 0.0
        %915 = vmatpush1.msra.mxu0 0.0
        %916 = vmatprep.mubr.f32.mxu0 0.0
        %917 = vmatmul.mubr.f32.gmra.mrb[0].mxu0 %v850
        %v918 = vpop.f32.mrb[0].mxu0
        %v919 = vadd.f32 0.0, %v918
        %v920 = vpop.f32.mrb[0].mxu0
        %921 = vdwg.mxu0
        %922 = vst.msk [vmem:[#allocation2] sm:$0xff] %vm760, %v919
        %923 = vrot.lane.b32.xlu0 %v759, 112
        %v924 = vpop.permute.xlu0 %923
        %925 = vrot.lane.b32.xlu0 %v672, 112
        %v926 = vpop.permute.xlu0 %925
        %v927 = vsel %vm760, %v924, 0
        %v929 = vsel %vm760, %v926, 0
        %931 = vmatprep.subr.mxu0 0.0
        %932 = vmatpush1.xpose.msra.mxu0 %v929
        %933 = vmatprep.subr.mxu0 0.0
        %934 = vmatpush1.xpose.msra.mxu0 0.0
        %935 = vmatprep.subr.mxu0 0.0
        %936 = vmatpush1.xpose.msra.mxu0 0.0
        %937 = vmatprep.subr.mxu0 0.0
        %938 = vmatpush1.xpose.msra.mxu0 0.0
        %939 = vmatprep.subr.mxu0 0.0
        %940 = vmatpush1.xpose.msra.mxu0 0.0
        %941 = vmatprep.subr.mxu0 0.0
        %942 = vmatpush1.xpose.msra.mxu0 0.0
        %943 = vmatprep.subr.mxu0 0.0
        %944 = vmatpush1.xpose.msra.mxu0 0.0
        %945 = vmatprep.subr.mxu0 0.0
        %946 = vmatpush1.xpose.msra.mxu0 0.0
        %947 = vmatprep.subr.mxu0 0.0
        %948 = vmatpush1.xpose.msra.mxu0 0.0
        %949 = vmatprep.subr.mxu0 0.0
        %950 = vmatpush1.xpose.msra.mxu0 0.0
        %951 = vmatprep.subr.mxu0 0.0
        %952 = vmatpush1.xpose.msra.mxu0 0.0
        %953 = vmatprep.subr.mxu0 0.0
        %954 = vmatpush1.xpose.msra.mxu0 0.0
        %955 = vmatprep.subr.mxu0 0.0
        %956 = vmatpush1.xpose.msra.mxu0 0.0
        %957 = vmatprep.subr.mxu0 0.0
        %958 = vmatpush1.xpose.msra.mxu0 0.0
        %959 = vmatprep.subr.mxu0 0.0
        %960 = vmatpush1.xpose.msra.mxu0 0.0
        %961 = vmatprep.subr.mxu0 0.0
        %962 = vmatpush1.xpose.msra.mxu0 0.0
        %963 = vmatprep.subr.mxu0 0.0
        %964 = vmatpush1.xpose.msra.mxu0 0.0
        %965 = vmatprep.subr.mxu0 0.0
        %966 = vmatpush1.xpose.msra.mxu0 0.0
        %967 = vmatprep.subr.mxu0 0.0
        %968 = vmatpush1.xpose.msra.mxu0 0.0
        %969 = vmatprep.subr.mxu0 0.0
        %970 = vmatpush1.xpose.msra.mxu0 0.0
        %971 = vmatprep.subr.mxu0 0.0
        %972 = vmatpush1.xpose.msra.mxu0 0.0
        %973 = vmatprep.subr.mxu0 0.0
        %974 = vmatpush1.xpose.msra.mxu0 0.0
        %975 = vmatprep.subr.mxu0 0.0
        %976 = vmatpush1.xpose.msra.mxu0 0.0
        %977 = vmatprep.subr.mxu0 0.0
        %978 = vmatpush1.xpose.msra.mxu0 0.0
        %979 = vmatprep.subr.mxu0 0.0
        %980 = vmatpush1.xpose.msra.mxu0 0.0
        %981 = vmatprep.subr.mxu0 0.0
        %982 = vmatpush1.xpose.msra.mxu0 0.0
        %983 = vmatprep.subr.mxu0 0.0
        %984 = vmatpush1.xpose.msra.mxu0 0.0
        %985 = vmatprep.subr.mxu0 0.0
        %986 = vmatpush1.xpose.msra.mxu0 0.0
        %987 = vmatprep.subr.mxu0 0.0
        %988 = vmatpush1.xpose.msra.mxu0 0.0
        %989 = vmatprep.subr.mxu0 0.0
        %990 = vmatpush1.xpose.msra.mxu0 0.0
        %991 = vmatprep.subr.mxu0 0.0
        %992 = vmatpush1.xpose.msra.mxu0 0.0
        %993 = vmatprep.subr.mxu0 0.0
        %994 = vmatpush1.xpose.msra.mxu0 0.0
        %995 = vmatprep.mubr.f32.mxu0 0.0
        %996 = vmatmul.mubr.f32.gmra.mrb[0].mxu0 %v927
        %v997 = vpop.f32.mrb[0].mxu0
        %v998 = vadd.f32 0.0, %v997
        %v999 = vpop.f32.mrb[0].mxu0
        %1000 = vdwg.mxu0
        %v1001 = vsel %vm837, %v998, -inf
        %1002 = vmax.xlane.f32.xlu0 %v1001
        %v1003 = vpop.xlane.xlu0 %1002
        %v1004 = vsub.f32 %v998, %v1003
        %v1005 = vmul.f32 %v1004, 1.442695
        %v1006 = vpow.pop %v1005
        %v1007 = vsel %vm837, %v1006, 0.0
        %1008 = vadd.xlane.f32.xlu0 %v1007
        %v1009 = vpop.xlane.xlu0 %1008
        %v1010 = vrcp.pop %v1009
        %v1011 = vmul.f32 %v1006, %v1010
        %1013 = vrot.lane.b32.xlu0 %v756, 112
        %v1014 = vpop.permute.xlu0 %1013
        %v1017 = vsel %vm837, %v1011, 0
        %1019 = vmatprep.subr.mxu0 0.0
        %1020 = vmatpush1.msra.mxu0 %v1014
        %1021 = vmatprep.subr.mxu0 0.0
        %1022 = vmatpush1.msra.mxu0 0.0
        %1023 = vmatprep.subr.mxu0 0.0
        %1024 = vmatpush1.msra.mxu0 0.0
        %1025 = vmatprep.subr.mxu0 0.0
        %1026 = vmatpush1.msra.mxu0 0.0
        %1027 = vmatprep.subr.mxu0 0.0
        %1028 = vmatpush1.msra.mxu0 0.0
        %1029 = vmatprep.subr.mxu0 0.0
        %1030 = vmatpush1.msra.mxu0 0.0
        %1031 = vmatprep.subr.mxu0 0.0
        %1032 = vmatpush1.msra.mxu0 0.0
        %1033 = vmatprep.subr.mxu0 0.0
        %1034 = vmatpush1.msra.mxu0 0.0
        %1035 = vmatprep.subr.mxu0 0.0
        %1036 = vmatpush1.msra.mxu0 0.0
        %1037 = vmatprep.subr.mxu0 0.0
        %1038 = vmatpush1.msra.mxu0 0.0
        %1039 = vmatprep.subr.mxu0 0.0
        %1040 = vmatpush1.msra.mxu0 0.0
        %1041 = vmatprep.subr.mxu0 0.0
        %1042 = vmatpush1.msra.mxu0 0.0
        %1043 = vmatprep.subr.mxu0 0.0
        %1044 = vmatpush1.msra.mxu0 0.0
        %1045 = vmatprep.subr.mxu0 0.0
        %1046 = vmatpush1.msra.mxu0 0.0
        %1047 = vmatprep.subr.mxu0 0.0
        %1048 = vmatpush1.msra.mxu0 0.0
        %1049 = vmatprep.subr.mxu0 0.0
        %1050 = vmatpush1.msra.mxu0 0.0
        %1051 = vmatprep.subr.mxu0 0.0
        %1052 = vmatpush1.msra.mxu0 0.0
        %1053 = vmatprep.subr.mxu0 0.0
        %1054 = vmatpush1.msra.mxu0 0.0
        %1055 = vmatprep.subr.mxu0 0.0
        %1056 = vmatpush1.msra.mxu0 0.0
        %1057 = vmatprep.subr.mxu0 0.0
        %1058 = vmatpush1.msra.mxu0 0.0
        %1059 = vmatprep.subr.mxu0 0.0
        %1060 = vmatpush1.msra.mxu0 0.0
        %1061 = vmatprep.subr.mxu0 0.0
        %1062 = vmatpush1.msra.mxu0 0.0
        %1063 = vmatprep.subr.mxu0 0.0
        %1064 = vmatpush1.msra.mxu0 0.0
        %1065 = vmatprep.subr.mxu0 0.0
        %1066 = vmatpush1.msra.mxu0 0.0
        %1067 = vmatprep.subr.mxu0 0.0
        %1068 = vmatpush1.msra.mxu0 0.0
        %1069 = vmatprep.subr.mxu0 0.0
        %1070 = vmatpush1.msra.mxu0 0.0
        %1071 = vmatprep.subr.mxu0 0.0
        %1072 = vmatpush1.msra.mxu0 0.0
        %1073 = vmatprep.subr.mxu0 0.0
        %1074 = vmatpush1.msra.mxu0 0.0
        %1075 = vmatprep.subr.mxu0 0.0
        %1076 = vmatpush1.msra.mxu0 0.0
        %1077 = vmatprep.subr.mxu0 0.0
        %1078 = vmatpush1.msra.mxu0 0.0
        %1079 = vmatprep.subr.mxu0 0.0
        %1080 = vmatpush1.msra.mxu0 0.0
        %1081 = vmatprep.subr.mxu0 0.0
        %1082 = vmatpush1.msra.mxu0 0.0
        %1083 = vmatprep.mubr.f32.mxu0 0.0
        %1084 = vmatmul.mubr.f32.gmra.mrb[0].mxu0 %v1017
        %v1085 = vpop.f32.mrb[0].mxu0
        %v1086 = vadd.f32 0.0, %v1085
        %v1087 = vpop.f32.mrb[0].mxu0
        %1088 = vdwg.mxu0
        %1090 = vrot.lane.b32.xlu0 %v1086, 16
        %v1091 = vpop.permute.xlu0 %1090
        %vm1093 = vcmask 261248
        %1094 = vst.msk [vmem:[#allocation2] sm:$0xff] %vm1093, %v1091
        %1095 = vrot.lane.b32.xlu0 %v759, 96
        %v1096 = vpop.permute.xlu0 %1095
        %1097 = vrot.lane.b32.xlu0 %v672, 96
        %v1098 = vpop.permute.xlu0 %1097
        %v1099 = vsel %vm760, %v1096, 0
        %v1101 = vsel %vm760, %v1098, 0
        %1103 = vmatprep.subr.mxu0 0.0
        %1104 = vmatpush1.xpose.msra.mxu0 %v1101
        %1105 = vmatprep.subr.mxu0 0.0
        %1106 = vmatpush1.xpose.msra.mxu0 0.0
        %1107 = vmatprep.subr.mxu0 0.0
        %1108 = vmatpush1.xpose.msra.mxu0 0.0
        %1109 = vmatprep.subr.mxu0 0.0
        %1110 = vmatpush1.xpose.msra.mxu0 0.0
        %1111 = vmatprep.subr.mxu0 0.0
        %1112 = vmatpush1.xpose.msra.mxu0 0.0
        %1113 = vmatprep.subr.mxu0 0.0
        %1114 = vmatpush1.xpose.msra.mxu0 0.0
        %1115 = vmatprep.subr.mxu0 0.0
        %1116 = vmatpush1.xpose.msra.mxu0 0.0
        %1117 = vmatprep.subr.mxu0 0.0
        %1118 = vmatpush1.xpose.msra.mxu0 0.0
        %1119 = vmatprep.subr.mxu0 0.0
        %1120 = vmatpush1.xpose.msra.mxu0 0.0
        %1121 = vmatprep.subr.mxu0 0.0
        %1122 = vmatpush1.xpose.msra.mxu0 0.0
        %1123 = vmatprep.subr.mxu0 0.0
        %1124 = vmatpush1.xpose.msra.mxu0 0.0
        %1125 = vmatprep.subr.mxu0 0.0
        %1126 = vmatpush1.xpose.msra.mxu0 0.0
        %1127 = vmatprep.subr.mxu0 0.0
        %1128 = vmatpush1.xpose.msra.mxu0 0.0
        %1129 = vmatprep.subr.mxu0 0.0
        %1130 = vmatpush1.xpose.msra.mxu0 0.0
        %1131 = vmatprep.subr.mxu0 0.0
        %1132 = vmatpush1.xpose.msra.mxu0 0.0
        %1133 = vmatprep.subr.mxu0 0.0
        %1134 = vmatpush1.xpose.msra.mxu0 0.0
        %1135 = vmatprep.subr.mxu0 0.0
        %1136 = vmatpush1.xpose.msra.mxu0 0.0
        %1137 = vmatprep.subr.mxu0 0.0
        %1138 = vmatpush1.xpose.msra.mxu0 0.0
        %1139 = vmatprep.subr.mxu0 0.0
        %1140 = vmatpush1.xpose.msra.mxu0 0.0
        %1141 = vmatprep.subr.mxu0 0.0
        %1142 = vmatpush1.xpose.msra.mxu0 0.0
        %1143 = vmatprep.subr.mxu0 0.0
        %1144 = vmatpush1.xpose.msra.mxu0 0.0
        %1145 = vmatprep.subr.mxu0 0.0
        %1146 = vmatpush1.xpose.msra.mxu0 0.0
        %1147 = vmatprep.subr.mxu0 0.0
        %1148 = vmatpush1.xpose.msra.mxu0 0.0
        %1149 = vmatprep.subr.mxu0 0.0
        %1150 = vmatpush1.xpose.msra.mxu0 0.0
        %1151 = vmatprep.subr.mxu0 0.0
        %1152 = vmatpush1.xpose.msra.mxu0 0.0
        %1153 = vmatprep.subr.mxu0 0.0
        %1154 = vmatpush1.xpose.msra.mxu0 0.0
        %1155 = vmatprep.subr.mxu0 0.0
        %1156 = vmatpush1.xpose.msra.mxu0 0.0
        %1157 = vmatprep.subr.mxu0 0.0
        %1158 = vmatpush1.xpose.msra.mxu0 0.0
        %1159 = vmatprep.subr.mxu0 0.0
        %1160 = vmatpush1.xpose.msra.mxu0 0.0
        %1161 = vmatprep.subr.mxu0 0.0
        %1162 = vmatpush1.xpose.msra.mxu0 0.0
        %1163 = vmatprep.subr.mxu0 0.0
        %1164 = vmatpush1.xpose.msra.mxu0 0.0
        %1165 = vmatprep.subr.mxu0 0.0
        %1166 = vmatpush1.xpose.msra.mxu0 0.0
        %1167 = vmatprep.mubr.f32.mxu0 0.0
        %1168 = vmatmul.mubr.f32.gmra.mrb[0].mxu0 %v1099
        %v1169 = vpop.f32.mrb[0].mxu0
        %v1170 = vadd.f32 0.0, %v1169
        %v1171 = vpop.f32.mrb[0].mxu0
        %1172 = vdwg.mxu0
        %v1173 = vsel %vm837, %v1170, -inf
        %1174 = vmax.xlane.f32.xlu0 %v1173
        %v1175 = vpop.xlane.xlu0 %1174
        %v1176 = vsub.f32 %v1170, %v1175
        %v1177 = vmul.f32 %v1176, 1.442695
        %v1178 = vpow.pop %v1177
        %v1179 = vsel %vm837, %v1178, 0.0
        %1180 = vadd.xlane.f32.xlu0 %v1179
        %v1181 = vpop.xlane.xlu0 %1180
        %v1182 = vrcp.pop %v1181
        %v1183 = vmul.f32 %v1178, %v1182
        %1184 = vrot.lane.b32.xlu0 %v756, 96
        %v1185 = vpop.permute.xlu0 %1184
        %v1188 = vsel %vm837, %v1183, 0
        %1190 = vmatprep.subr.mxu0 0.0
        %1191 = vmatpush1.msra.mxu0 %v1185
        %1192 = vmatprep.subr.mxu0 0.0
        %1193 = vmatpush1.msra.mxu0 0.0
        %1194 = vmatprep.subr.mxu0 0.0
        %1195 = vmatpush1.msra.mxu0 0.0
        %1196 = vmatprep.subr.mxu0 0.0
        %1197 = vmatpush1.msra.mxu0 0.0
        %1198 = vmatprep.subr.mxu0 0.0
        %1199 = vmatpush1.msra.mxu0 0.0
        %1200 = vmatprep.subr.mxu0 0.0
        %1201 = vmatpush1.msra.mxu0 0.0
        %1202 = vmatprep.subr.mxu0 0.0
        %1203 = vmatpush1.msra.mxu0 0.0
        %1204 = vmatprep.subr.mxu0 0.0
        %1205 = vmatpush1.msra.mxu0 0.0
        %1206 = vmatprep.subr.mxu0 0.0
        %1207 = vmatpush1.msra.mxu0 0.0
        %1208 = vmatprep.subr.mxu0 0.0
        %1209 = vmatpush1.msra.mxu0 0.0
        %1210 = vmatprep.subr.mxu0 0.0
        %1211 = vmatpush1.msra.mxu0 0.0
        %1212 = vmatprep.subr.mxu0 0.0
        %1213 = vmatpush1.msra.mxu0 0.0
        %1214 = vmatprep.subr.mxu0 0.0
        %1215 = vmatpush1.msra.mxu0 0.0
        %1216 = vmatprep.subr.mxu0 0.0
        %1217 = vmatpush1.msra.mxu0 0.0
        %1218 = vmatprep.subr.mxu0 0.0
        %1219 = vmatpush1.msra.mxu0 0.0
        %1220 = vmatprep.subr.mxu0 0.0
        %1221 = vmatpush1.msra.mxu0 0.0
        %1222 = vmatprep.subr.mxu0 0.0
        %1223 = vmatpush1.msra.mxu0 0.0
        %1224 = vmatprep.subr.mxu0 0.0
        %1225 = vmatpush1.msra.mxu0 0.0
        %1226 = vmatprep.subr.mxu0 0.0
        %1227 = vmatpush1.msra.mxu0 0.0
        %1228 = vmatprep.subr.mxu0 0.0
        %1229 = vmatpush1.msra.mxu0 0.0
        %1230 = vmatprep.subr.mxu0 0.0
        %1231 = vmatpush1.msra.mxu0 0.0
        %1232 = vmatprep.subr.mxu0 0.0
        %1233 = vmatpush1.msra.mxu0 0.0
        %1234 = vmatprep.subr.mxu0 0.0
        %1235 = vmatpush1.msra.mxu0 0.0
        %1236 = vmatprep.subr.mxu0 0.0
        %1237 = vmatpush1.msra.mxu0 0.0
        %1238 = vmatprep.subr.mxu0 0.0
        %1239 = vmatpush1.msra.mxu0 0.0
        %1240 = vmatprep.subr.mxu0 0.0
        %1241 = vmatpush1.msra.mxu0 0.0
        %1242 = vmatprep.subr.mxu0 0.0
        %1243 = vmatpush1.msra.mxu0 0.0
        %1244 = vmatprep.subr.mxu0 0.0
        %1245 = vmatpush1.msra.mxu0 0.0
        %1246 = vmatprep.subr.mxu0 0.0
        %1247 = vmatpush1.msra.mxu0 0.0
        %1248 = vmatprep.subr.mxu0 0.0
        %1249 = vmatpush1.msra.mxu0 0.0
        %1250 = vmatprep.subr.mxu0 0.0
        %1251 = vmatpush1.msra.mxu0 0.0
        %1252 = vmatprep.subr.mxu0 0.0
        %1253 = vmatpush1.msra.mxu0 0.0
        %1254 = vmatprep.mubr.f32.mxu0 0.0
        %1255 = vmatmul.mubr.f32.gmra.mrb[0].mxu0 %v1188
        %v1256 = vpop.f32.mrb[0].mxu0
        %v1257 = vadd.f32 0.0, %v1256
        %v1258 = vpop.f32.mrb[0].mxu0
        %1259 = vdwg.mxu0
        %1261 = vrot.lane.b32.xlu0 %v1257, 32
        %v1262 = vpop.permute.xlu0 %1261
        %vm1264 = vcmask 392448
        %1265 = vst.msk [vmem:[#allocation2] sm:$0xff] %vm1264, %v1262
        %1266 = vrot.lane.b32.xlu0 %v759, 80
        %v1267 = vpop.permute.xlu0 %1266
        %1268 = vrot.lane.b32.xlu0 %v672, 80
        %v1269 = vpop.permute.xlu0 %1268
        %v1270 = vsel %vm760, %v1267, 0
        %v1272 = vsel %vm760, %v1269, 0
        %1274 = vmatprep.subr.mxu0 0.0
        %1275 = vmatpush1.xpose.msra.mxu0 %v1272
        %1276 = vmatprep.subr.mxu0 0.0
        %1277 = vmatpush1.xpose.msra.mxu0 0.0
        %1278 = vmatprep.subr.mxu0 0.0
        %1279 = vmatpush1.xpose.msra.mxu0 0.0
        %1280 = vmatprep.subr.mxu0 0.0
        %1281 = vmatpush1.xpose.msra.mxu0 0.0
        %1282 = vmatprep.subr.mxu0 0.0
        %1283 = vmatpush1.xpose.msra.mxu0 0.0
        %1284 = vmatprep.subr.mxu0 0.0
        %1285 = vmatpush1.xpose.msra.mxu0 0.0
        %1286 = vmatprep.subr.mxu0 0.0
        %1287 = vmatpush1.xpose.msra.mxu0 0.0
        %1288 = vmatprep.subr.mxu0 0.0
        %1289 = vmatpush1.xpose.msra.mxu0 0.0
        %1290 = vmatprep.subr.mxu0 0.0
        %1291 = vmatpush1.xpose.msra.mxu0 0.0
        %1292 = vmatprep.subr.mxu0 0.0
        %1293 = vmatpush1.xpose.msra.mxu0 0.0
        %1294 = vmatprep.subr.mxu0 0.0
        %1295 = vmatpush1.xpose.msra.mxu0 0.0
        %1296 = vmatprep.subr.mxu0 0.0
        %1297 = vmatpush1.xpose.msra.mxu0 0.0
        %1298 = vmatprep.subr.mxu0 0.0
        %1299 = vmatpush1.xpose.msra.mxu0 0.0
        %1300 = vmatprep.subr.mxu0 0.0
        %1301 = vmatpush1.xpose.msra.mxu0 0.0
        %1302 = vmatprep.subr.mxu0 0.0
        %1303 = vmatpush1.xpose.msra.mxu0 0.0
        %1304 = vmatprep.subr.mxu0 0.0
        %1305 = vmatpush1.xpose.msra.mxu0 0.0
        %1306 = vmatprep.subr.mxu0 0.0
        %1307 = vmatpush1.xpose.msra.mxu0 0.0
        %1308 = vmatprep.subr.mxu0 0.0
        %1309 = vmatpush1.xpose.msra.mxu0 0.0
        %1310 = vmatprep.subr.mxu0 0.0
        %1311 = vmatpush1.xpose.msra.mxu0 0.0
        %1312 = vmatprep.subr.mxu0 0.0
        %1313 = vmatpush1.xpose.msra.mxu0 0.0
        %1314 = vmatprep.subr.mxu0 0.0
        %1315 = vmatpush1.xpose.msra.mxu0 0.0
        %1316 = vmatprep.subr.mxu0 0.0
        %1317 = vmatpush1.xpose.msra.mxu0 0.0
        %1318 = vmatprep.subr.mxu0 0.0
        %1319 = vmatpush1.xpose.msra.mxu0 0.0
        %1320 = vmatprep.subr.mxu0 0.0
        %1321 = vmatpush1.xpose.msra.mxu0 0.0
        %1322 = vmatprep.subr.mxu0 0.0
        %1323 = vmatpush1.xpose.msra.mxu0 0.0
        %1324 = vmatprep.subr.mxu0 0.0
        %1325 = vmatpush1.xpose.msra.mxu0 0.0
        %1326 = vmatprep.subr.mxu0 0.0
        %1327 = vmatpush1.xpose.msra.mxu0 0.0
        %1328 = vmatprep.subr.mxu0 0.0
        %1329 = vmatpush1.xpose.msra.mxu0 0.0
        %1330 = vmatprep.subr.mxu0 0.0
        %1331 = vmatpush1.xpose.msra.mxu0 0.0
        %1332 = vmatprep.subr.mxu0 0.0
        %1333 = vmatpush1.xpose.msra.mxu0 0.0
        %1334 = vmatprep.subr.mxu0 0.0
        %1335 = vmatpush1.xpose.msra.mxu0 0.0
        %1336 = vmatprep.subr.mxu0 0.0
        %1337 = vmatpush1.xpose.msra.mxu0 0.0
        %1338 = vmatprep.mubr.f32.mxu0 0.0
        %1339 = vmatmul.mubr.f32.gmra.mrb[0].mxu0 %v1270
        %v1340 = vpop.f32.mrb[0].mxu0
        %v1341 = vadd.f32 0.0, %v1340
        %v1342 = vpop.f32.mrb[0].mxu0
        %1343 = vdwg.mxu0
        %v1344 = vsel %vm837, %v1341, -inf
        %1345 = vmax.xlane.f32.xlu0 %v1344
        %v1346 = vpop.xlane.xlu0 %1345
        %v1347 = vsub.f32 %v1341, %v1346
        %v1348 = vmul.f32 %v1347, 1.442695
        %v1349 = vpow.pop %v1348
        %v1350 = vsel %vm837, %v1349, 0.0
        %1351 = vadd.xlane.f32.xlu0 %v1350
        %v1352 = vpop.xlane.xlu0 %1351
        %v1353 = vrcp.pop %v1352
        %v1354 = vmul.f32 %v1349, %v1353
        %1355 = vrot.lane.b32.xlu0 %v756, 80
        %v1356 = vpop.permute.xlu0 %1355
        %v1359 = vsel %vm837, %v1354, 0
        %1361 = vmatprep.subr.mxu0 0.0
        %1362 = vmatpush1.msra.mxu0 %v1356
        %1363 = vmatprep.subr.mxu0 0.0
        %1364 = vmatpush1.msra.mxu0 0.0
        %1365 = vmatprep.subr.mxu0 0.0
        %1366 = vmatpush1.msra.mxu0 0.0
        %1367 = vmatprep.subr.mxu0 0.0
        %1368 = vmatpush1.msra.mxu0 0.0
        %1369 = vmatprep.subr.mxu0 0.0
        %1370 = vmatpush1.msra.mxu0 0.0
        %1371 = vmatprep.subr.mxu0 0.0
        %1372 = vmatpush1.msra.mxu0 0.0
        %1373 = vmatprep.subr.mxu0 0.0
        %1374 = vmatpush1.msra.mxu0 0.0
        %1375 = vmatprep.subr.mxu0 0.0
        %1376 = vmatpush1.msra.mxu0 0.0
        %1377 = vmatprep.subr.mxu0 0.0
        %1378 = vmatpush1.msra.mxu0 0.0
        %1379 = vmatprep.subr.mxu0 0.0
        %1380 = vmatpush1.msra.mxu0 0.0
        %1381 = vmatprep.subr.mxu0 0.0
        %1382 = vmatpush1.msra.mxu0 0.0
        %1383 = vmatprep.subr.mxu0 0.0
        %1384 = vmatpush1.msra.mxu0 0.0
        %1385 = vmatprep.subr.mxu0 0.0
        %1386 = vmatpush1.msra.mxu0 0.0
        %1387 = vmatprep.subr.mxu0 0.0
        %1388 = vmatpush1.msra.mxu0 0.0
        %1389 = vmatprep.subr.mxu0 0.0
        %1390 = vmatpush1.msra.mxu0 0.0
        %1391 = vmatprep.subr.mxu0 0.0
        %1392 = vmatpush1.msra.mxu0 0.0
        %1393 = vmatprep.subr.mxu0 0.0
        %1394 = vmatpush1.msra.mxu0 0.0
        %1395 = vmatprep.subr.mxu0 0.0
        %1396 = vmatpush1.msra.mxu0 0.0
        %1397 = vmatprep.subr.mxu0 0.0
        %1398 = vmatpush1.msra.mxu0 0.0
        %1399 = vmatprep.subr.mxu0 0.0
        %1400 = vmatpush1.msra.mxu0 0.0
        %1401 = vmatprep.subr.mxu0 0.0
        %1402 = vmatpush1.msra.mxu0 0.0
        %1403 = vmatprep.subr.mxu0 0.0
        %1404 = vmatpush1.msra.mxu0 0.0
        %1405 = vmatprep.subr.mxu0 0.0
        %1406 = vmatpush1.msra.mxu0 0.0
        %1407 = vmatprep.subr.mxu0 0.0
        %1408 = vmatpush1.msra.mxu0 0.0
        %1409 = vmatprep.subr.mxu0 0.0
        %1410 = vmatpush1.msra.mxu0 0.0
        %1411 = vmatprep.subr.mxu0 0.0
        %1412 = vmatpush1.msra.mxu0 0.0
        %1413 = vmatprep.subr.mxu0 0.0
        %1414 = vmatpush1.msra.mxu0 0.0
        %1415 = vmatprep.subr.mxu0 0.0
        %1416 = vmatpush1.msra.mxu0 0.0
        %1417 = vmatprep.subr.mxu0 0.0
        %1418 = vmatpush1.msra.mxu0 0.0
        %1419 = vmatprep.subr.mxu0 0.0
        %1420 = vmatpush1.msra.mxu0 0.0
        %1421 = vmatprep.subr.mxu0 0.0
        %1422 = vmatpush1.msra.mxu0 0.0
        %1423 = vmatprep.subr.mxu0 0.0
        %1424 = vmatpush1.msra.mxu0 0.0
        %1425 = vmatprep.mubr.f32.mxu0 0.0
        %1426 = vmatmul.mubr.f32.gmra.mrb[0].mxu0 %v1359
        %v1427 = vpop.f32.mrb[0].mxu0
        %v1428 = vadd.f32 0.0, %v1427
        %v1429 = vpop.f32.mrb[0].mxu0
        %1430 = vdwg.mxu0
        %1432 = vrot.lane.b32.xlu0 %v1428, 48
        %v1433 = vpop.permute.xlu0 %1432
        %vm1435 = vcmask 523648
        %1436 = vst.msk [vmem:[#allocation2] sm:$0xff] %vm1435, %v1433
        %v1437 = vld [vmem:[#allocation2] sm:$0xff]
        %v1438 = vld [vmem:[%s9] sm:$0xff]
        %v1439 = vld [vmem:[%s9 + $0x8] sm:$0xff]
        %v1440 = vld [vmem:[%s9 + $0x10] sm:$0xff]
        %v1441 = vld [vmem:[%s9 + $0x18] sm:$0xff]
        %v1442 = vld [vmem:[%s9 + $0x20] sm:$0xff]
        %v1443 = vld [vmem:[%s9 + $0x28] sm:$0xff]
        %v1444 = vld [vmem:[%s9 + $0x30] sm:$0xff]
        %v1445 = vld [vmem:[%s9 + $0x38] sm:$0xff]
        %v1446 = vld [vmem:[%s10] sm:$0x1]
        %v1448 = vlaneseq
        %v1449 = vshrl.u32 %v1448, 7
        %v1450 = vsub.s32 0, %v1449
        %v1451 = vrot.slane %v1446, %v1450
        %vm1453 = vcmask 523264
        %v1455 = vsel %vm1453, %v1437, 0
        %1457 = vmatprep.subr.mxu0 0.0
        %1458 = vmatpush1.msra.mxu0 %v1438
        %1459 = vmatprep.subr.mxu0 0.0
        %1460 = vmatpush1.msra.mxu0 %v1439
        %1461 = vmatprep.subr.mxu0 0.0
        %1462 = vmatpush1.msra.mxu0 %v1440
        %1463 = vmatprep.subr.mxu0 0.0
        %1464 = vmatpush1.msra.mxu0 %v1441
        %1465 = vmatprep.subr.mxu0 0.0
        %1466 = vmatpush1.msra.mxu0 %v1442
        %1467 = vmatprep.subr.mxu0 0.0
        %1468 = vmatpush1.msra.mxu0 %v1443
        %1469 = vmatprep.subr.mxu0 0.0
        %1470 = vmatpush1.msra.mxu0 %v1444
        %1471 = vmatprep.subr.mxu0 0.0
        %1472 = vmatpush1.msra.mxu0 %v1445
        %1473 = vmatprep.subr.mxu0 0.0
        %1474 = vmatpush1.msra.mxu0 0.0
        %1475 = vmatprep.subr.mxu0 0.0
        %1476 = vmatpush1.msra.mxu0 0.0
        %1477 = vmatprep.subr.mxu0 0.0
        %1478 = vmatpush1.msra.mxu0 0.0
        %1479 = vmatprep.subr.mxu0 0.0
        %1480 = vmatpush1.msra.mxu0 0.0
        %1481 = vmatprep.subr.mxu0 0.0
        %1482 = vmatpush1.msra.mxu0 0.0
        %1483 = vmatprep.subr.mxu0 0.0
        %1484 = vmatpush1.msra.mxu0 0.0
        %1485 = vmatprep.subr.mxu0 0.0
        %1486 = vmatpush1.msra.mxu0 0.0
        %1487 = vmatprep.subr.mxu0 0.0
        %1488 = vmatpush1.msra.mxu0 0.0
        %1489 = vmatprep.subr.mxu0 0.0
        %1490 = vmatpush1.msra.mxu0 0.0
        %1491 = vmatprep.subr.mxu0 0.0
        %1492 = vmatpush1.msra.mxu0 0.0
        %1493 = vmatprep.subr.mxu0 0.0
        %1494 = vmatpush1.msra.mxu0 0.0
        %1495 = vmatprep.subr.mxu0 0.0
        %1496 = vmatpush1.msra.mxu0 0.0
        %1497 = vmatprep.subr.mxu0 0.0
        %1498 = vmatpush1.msra.mxu0 0.0
        %1499 = vmatprep.subr.mxu0 0.0
        %1500 = vmatpush1.msra.mxu0 0.0
        %1501 = vmatprep.subr.mxu0 0.0
        %1502 = vmatpush1.msra.mxu0 0.0
        %1503 = vmatprep.subr.mxu0 0.0
        %1504 = vmatpush1.msra.mxu0 0.0
        %1505 = vmatprep.subr.mxu0 0.0
        %1506 = vmatpush1.msra.mxu0 0.0
        %1507 = vmatprep.subr.mxu0 0.0
        %1508 = vmatpush1.msra.mxu0 0.0
        %1509 = vmatprep.subr.mxu0 0.0
        %1510 = vmatpush1.msra.mxu0 0.0
        %1511 = vmatprep.subr.mxu0 0.0
        %1512 = vmatpush1.msra.mxu0 0.0
        %1513 = vmatprep.subr.mxu0 0.0
        %1514 = vmatpush1.msra.mxu0 0.0
        %1515 = vmatprep.subr.mxu0 0.0
        %1516 = vmatpush1.msra.mxu0 0.0
        %1517 = vmatprep.subr.mxu0 0.0
        %1518 = vmatpush1.msra.mxu0 0.0
        %1519 = vmatprep.subr.mxu0 0.0
        %1520 = vmatpush1.msra.mxu0 0.0
        %1521 = vmatprep.mubr.f32.mxu0 0.0
        %1522 = vmatmul.mubr.f32.gmra.mrb[0].mxu0 %v1455
        %v1523 = vpop.f32.mrb[0].mxu0
        %v1524 = vadd.f32 %v1451, %v1523
        %v1525 = vpop.f32.mrb[0].mxu0
        %1526 = vdwg.mxu0
        %1527 = vst.msk [vmem:[%s502] sm:$0xff] %vm517, %v1524
        %s1528 = sand.u32 %s302, 1
        %s1529 = scalar_lea.sflag [#allocation5], %s1528
        %s1530 = sand.u32 %s302, 1
        %s1531 = smul.addr %s1530, 8
        %s1532 = scalar_lea.vmem [#allocation11], %s1531
        // Predicated region
        $region81: #{tpu_custom_call.1} parent=63 // pred_check
          %p1533 = pneg %p312
        $region82: #{tpu_custom_call.1} parent=63 // pred_check_branch
          %1535 = sbr.rel (%p1533) target = $region84
        $region83: #{tpu_custom_call.1} parent=63 // pred_region
          %s1537 = ssub.s32 128, 128
          %1538 = vsyncadd %s1529, %s1537
          %s1539 = sadd.s32 %s37, %s36
          %s1540 = smul.addr %s1539, 128
          %s1541 = scalar_lea.hbm %s11, %s1540
          %s1543 = sshll.u32 %s1532, 4
          %s1544 = int_to_ptr.vmem [resolvable:$true] %s1543
          %1546 = dma.vmem_to_hbm [thread:$0]  %s1544, 128, %s1541, %s1529
        $region84: #{tpu_custom_call.1} parent=63 // pred_fallthru
          _
      $region64: #{tpu_custom_call.1} parent=5 // pred_fallthru
        _
      %p1547 = scmp.le.s32.totalorder 2, %s27
      // Predicated region
      $region85: #{tpu_custom_call.1} parent=5 // pred_check
        %p1548 = pneg %p1547
      $region86: #{tpu_custom_call.1} parent=5 // pred_check_branch
        %1550 = sbr.rel (%p1548) target = $region88
      $region87: #{tpu_custom_call.1} parent=5 // pred_region
        %s1551 = ssub.s32 %s27, 2
        // Predicated region
        $region89: #{tpu_custom_call.1} parent=87 // pred_check
          %p1552 = pneg %p318
        $region90: #{tpu_custom_call.1} parent=87 // pred_check_branch
          %1554 = sbr.rel (%p1552) target = $region92
        $region91: #{tpu_custom_call.1} parent=87 // pred_region
          %s1555 = sand.u32 %s303, 1
          %s1556 = scalar_lea.sflag [#allocation5], %s1555
          %s1557 = sand.u32 %s303, 1
          %s1558 = smul.addr %s1557, 8
          %s1559 = scalar_lea.vmem [#allocation11], %s1558
          %1560 = dma.done %s1556, 128
        $region92: #{tpu_custom_call.1} parent=87 // pred_fallthru
          _
      $region88: #{tpu_custom_call.1} parent=5 // pred_fallthru
        _
    $region6: #{tpu_custom_call.1} parent=1 // loop_footer
      %s31 = sadd.s32 1, %s27
    $region7: #{tpu_custom_call.1} parent=1 // loop_footer_branch
      %26 = sbr.rel target = $region3
    $region8: #{tpu_custom_call.1} parent=1 // loop_exit
      _
    %1561 = vsyncpa [#allocation4], 1
    %s1562 = scalar_lea.sflag [#allocation4], 1
    %1563 = vsyncpa %s1562, 1
    %1564 = vsyncpa [#allocation7], 1
    %s1565 = scalar_lea.sflag [#allocation7], 1
    %1566 = vsyncpa %s1565, 1
    %1567 = vsyncpa [#allocation10], 1
    %1568 = vsyncpa [#allocation5], 1
    %s1569 = scalar_lea.sflag [#allocation5], 1
    %1570 = vsyncpa %s1569, 1

</llo_original>
